<compile_context>
chip_gen: v7x
topology: tpu7x:2x2x1
jax: 0.10.0
libtpu: 0.0.40
codegen_flags: <defaults>
</compile_context>

<pallas_src>
import math
import functools

import jax
import jax.numpy as jnp
from jax.experimental import pallas as pl
from jax.experimental.pallas import tpu as pltpu


def _layer_norm(h, gamma, beta, eps=1e-5):
    mu = jnp.mean(h, axis=-1, keepdims=True)
    var = jnp.mean(jnp.square(h - mu), axis=-1, keepdims=True)
    return (h - mu) * jax.lax.rsqrt(var + eps) * gamma + beta


def _encoder_block_kernel(x_ref, wq_ref, wk_ref, wv_ref, bq_ref, bk_ref, bv_ref,
                          wo_ref, bo_ref, w1_ref, b1_ref, w2_ref, b2_ref,
                          g1_ref, beta1_ref, g2_ref, beta2_ref,
                          out_ref,
                          q_sc, k_sc, v_sc, vcat_sc,
                          *, num_heads, block_q):
    """Grid = (batch, query_block). One step = one (b, q-block) tile."""
    S = x_ref.shape[1]
    D = x_ref.shape[2]
    H = num_heads
    hd = D // H
    TQ = block_q
    scale = 1.0 / math.sqrt(hd)
    qi = pl.program_id(1)

    # ---- K/V projection for the full sequence: once per batch element ----
    @pl.when(qi == 0)
    def _compute_kv():
        xb = x_ref[0].astype(jnp.bfloat16)                      # (S, D)
        k2 = jnp.dot(xb, wk_ref[...], preferred_element_type=jnp.float32) + bk_ref[...]
        v2 = jnp.dot(xb, wv_ref[...], preferred_element_type=jnp.float32) + bv_ref[...]
        for h in range(H):                                      # head-split into scratch
            k_sc[h] = k2[:, h * hd:(h + 1) * hd].astype(jnp.bfloat16)
            v_sc[h] = v2[:, h * hd:(h + 1) * hd].astype(jnp.bfloat16)

    # ---- Q projection for this query block ----
    q_start = pl.multiple_of(qi * TQ, TQ)
    xq = x_ref[0, pl.ds(q_start, TQ), :]                        # (TQ, D) f32 (residual)
    q2 = jnp.dot(xq.astype(jnp.bfloat16), wq_ref[...],
                 preferred_element_type=jnp.float32) + bq_ref[...]
    for h in range(H):
        q_sc[h] = q2[:, h * hd:(h + 1) * hd].astype(jnp.bfloat16)

    # ---- batched-head scaled dot-product attention (f32 softmax) ----
    logits = jnp.einsum('hqd,hkd->hqk', q_sc[...], k_sc[...],
                        preferred_element_type=jnp.float32) * scale      # (H, TQ, S)
    m = jnp.max(logits, axis=-1, keepdims=True)
    e = jnp.exp(logits - m)
    denom = jnp.sum(e, axis=-1, keepdims=True)
    probs = (e * pl.reciprocal(denom, approx=True)).astype(jnp.bfloat16)
    vals = jnp.einsum('hqk,hkd->hqd', probs, v_sc[...],
                      preferred_element_type=jnp.float32)                # (H, TQ, hd)

    # head recombination into a VMEM scratch accumulator (no concatenate)
    for h in range(H):
        vcat_sc[:, h * hd:(h + 1) * hd] = vals[h].astype(jnp.bfloat16)

    attn_out = jnp.dot(vcat_sc[...], wo_ref[...],
                       preferred_element_type=jnp.float32) + bo_ref[...]  # (TQ, D)

    # ---- residual + LayerNorm1 ----
    h1 = _layer_norm(xq + attn_out, g1_ref[...], beta1_ref[...])

    # ---- feed-forward: Linear -> ReLU -> Linear ----
    f = jnp.dot(h1.astype(jnp.bfloat16), w1_ref[...],
                preferred_element_type=jnp.float32) + b1_ref[...]
    f = jnp.maximum(f, 0.0)
    f = jnp.dot(f.astype(jnp.bfloat16), w2_ref[...],
                preferred_element_type=jnp.float32) + b2_ref[...]

    # ---- residual + LayerNorm2 ----
    y = _layer_norm(h1 + f, g2_ref[...], beta2_ref[...])
    out_ref[0] = y.astype(out_ref.dtype)


def _pick_block_q(S):
    for cand in (256, 128, 64, 32, 16, 8):
        if S % cand == 0:
            return min(cand, S)
    return S


def _vmem_limit_bytes(S, D, F, H, TQ):
    """Rough VMEM footprint (lane-padded), with headroom below 64 MiB (v7x)."""
    hd = D // H
    pad = lambda n: max(128, -(-n // 128) * 128)
    bf16, f32 = 2, 4
    weights = (3 * D * pad(D) + D * pad(D) + D * pad(F) + F * pad(D)) * bf16
    biases = (10 * pad(D) + pad(F)) * f32
    io = (S * pad(D) + TQ * pad(D)) * f32
    scratch = (H * TQ * pad(hd) + 2 * H * S * pad(hd) + TQ * pad(D)) * bf16
    interm = (H * TQ * pad(S) + TQ * pad(F) + 6 * TQ * pad(D) + 4 * S * pad(D)) * f32
    est = int(1.5 * (2 * weights + 2 * biases + 2 * io + scratch + interm))
    return max(32 << 20, min(est, 56 << 20))


def encoder_block(x, kparams, *, num_heads, block_q=None):
    """x: (B, S, D) float32.  kparams: output of prepare_params (bf16 weights)."""
    B, S, D = x.shape
    H = num_heads
    assert D % H == 0
    hd = D // H
    F = kparams["w1"].shape[1]
    TQ = block_q or _pick_block_q(S)
    assert S % TQ == 0
    NQ = S // TQ

    full = lambda r, c: pl.BlockSpec((r, c), lambda b, qi: (0, 0))
    in_specs = [
        pl.BlockSpec((1, S, D), lambda b, qi: (b, 0, 0)),   # x (full sequence per batch)
        full(D, D), full(D, D), full(D, D),                 # wq, wk, wv (pre-transposed)
        full(1, D), full(1, D), full(1, D),                 # bq, bk, bv
        full(D, D), full(1, D),                             # wo (pre-transposed), bo
        full(D, F), full(1, F),                             # w1 (pre-transposed), b1
        full(F, D), full(1, D),                             # w2 (pre-transposed), b2
        full(1, D), full(1, D), full(1, D), full(1, D),     # g1, beta1, g2, beta2
    ]
    out_spec = pl.BlockSpec((1, TQ, D), lambda b, qi: (b, qi, 0))

    kernel = functools.partial(_encoder_block_kernel, num_heads=H, block_q=TQ)
    return pl.pallas_call(
        kernel,
        out_shape=jax.ShapeDtypeStruct((B, S, D), jnp.float32),
        grid_spec=pltpu.PrefetchScalarGridSpec(
            num_scalar_prefetch=0,
            grid=(B, NQ),
            in_specs=in_specs,
            out_specs=out_spec,
            scratch_shapes=[
                pltpu.VMEM((H, TQ, hd), jnp.bfloat16),   # Q, head-split
                pltpu.VMEM((H, S, hd), jnp.bfloat16),    # K cache (per batch element)
                pltpu.VMEM((H, S, hd), jnp.bfloat16),    # V cache (per batch element)
                pltpu.VMEM((TQ, D), jnp.bfloat16),       # recombined head outputs
            ],
        ),
        compiler_params=pltpu.CompilerParams(
            dimension_semantics=("parallel", "arbitrary"),
            vmem_limit_bytes=_vmem_limit_bytes(S, D, F, H, TQ),
        ),
    )(
        x,
        kparams["wq"], kparams["wk"], kparams["wv"],
        kparams["bq"], kparams["bk"], kparams["bv"],
        kparams["wo"], kparams["bo"],
        kparams["w1"], kparams["b1"], kparams["w2"], kparams["b2"],
        kparams["g1"], kparams["beta1"], kparams["g2"], kparams["beta2"],
    )


def init_params(key, input_dim, num_heads, dim_feedforward):
    """Deterministic synthetic init matching the nn.Module parameter shapes (PyTorch layout)."""
    D, F = input_dim, dim_feedforward
    ks = jax.random.split(key, 4)

    def xavier(k, shape):
        fan_out, fan_in = shape
        bound = math.sqrt(6.0 / (fan_in + fan_out))
        return jax.random.uniform(k, shape, jnp.float32, -bound, bound)

    return {
        "wqkv": xavier(ks[0], (3 * D, D)),
        "bqkv": jnp.zeros((1, 3 * D), jnp.float32),
        "wo": xavier(ks[1], (D, D)),
        "bo": jnp.zeros((1, D), jnp.float32),
        "w1": xavier(ks[2], (F, D)),
        "b1": jnp.zeros((1, F), jnp.float32),
        "w2": xavier(ks[3], (D, F)),
        "b2": jnp.zeros((1, D), jnp.float32),
        "g1": jnp.ones((1, D), jnp.float32),
        "beta1": jnp.zeros((1, D), jnp.float32),
        "g2": jnp.ones((1, D), jnp.float32),
        "beta2": jnp.zeros((1, D), jnp.float32),
    }


def prepare_params(params, num_heads):
    """Reorder the interleaved PyTorch qkv layout into head-major Q|K|V slabs,
    pre-transpose every weight, and cast matmul weights to bf16 (done once in XLA)."""
    D = params["wo"].shape[0]
    H = num_heads
    hd = D // H
    idx = jnp.arange(3 * D).reshape(H, 3, hd)        # [h, {q,k,v}, j] -> h*3*hd + which*hd + j
    q_idx = idx[:, 0, :].reshape(-1)
    k_idx = idx[:, 1, :].reshape(-1)
    v_idx = idx[:, 2, :].reshape(-1)
    wqkv = params["wqkv"]                            # (3D, D)
    bqkv = params["bqkv"][0]                         # (3D,)
    bf16 = jnp.bfloat16
    return {
        "wq": wqkv[q_idx].T.astype(bf16),            # (D, D)
        "wk": wqkv[k_idx].T.astype(bf16),
        "wv": wqkv[v_idx].T.astype(bf16),
        "bq": bqkv[q_idx][None, :],                  # (1, D) f32
        "bk": bqkv[k_idx][None, :],
        "bv": bqkv[v_idx][None, :],
        "wo": params["wo"].T.astype(bf16),           # (D, D)
        "bo": params["bo"],
        "w1": params["w1"].T.astype(bf16),           # (D, F)
        "b1": params["b1"],
        "w2": params["w2"].T.astype(bf16),           # (F, D)
        "b2": params["b2"],
        "g1": params["g1"], "beta1": params["beta1"],
        "g2": params["g2"], "beta2": params["beta2"],
    }


def _reference(x, p, num_heads):
    """Pure-JAX f32 reference mirroring the PyTorch forward."""
    B, S, D = x.shape
    hd = D // num_heads
    qkv = x @ p["wqkv"].T + p["bqkv"][0]
    qkv = qkv.reshape(B, S, num_heads, 3 * hd).transpose(0, 2, 1, 3)
    q, k, v = qkv[..., :hd], qkv[..., hd:2 * hd], qkv[..., 2 * hd:]
    logits = jnp.einsum("bhsd,bhtd->bhst", q, k) / math.sqrt(hd)
    attn = jax.nn.softmax(logits, axis=-1)
    vals = jnp.einsum("bhst,bhtd->bhsd", attn, v).transpose(0, 2, 1, 3).reshape(B, S, D)
    o = vals @ p["wo"].T + p["bo"][0]

    def ln(h, g, b):
        mu = h.mean(-1, keepdims=True)
        var = ((h - mu) ** 2).mean(-1, keepdims=True)
        return (h - mu) * jax.lax.rsqrt(var + 1e-5) * g[0] + b[0]

    h = ln(x + o, p["g1"], p["beta1"])
    f = jnp.maximum(h @ p["w1"].T + p["b1"][0], 0.0) @ p["w2"].T + p["b2"][0]
    return ln(h + f, p["g2"], p["beta2"])


if __name__ == "__main__":
    B, S, D = 2, 8, 32
    num_heads = 4
    dim_feedforward = 64

    key = jax.random.PRNGKey(0)
    kx, kp = jax.random.split(key)
    x = jax.random.normal(kx, (B, S, D), jnp.float32)
    params = init_params(kp, D, num_heads, dim_feedforward)
    kparams = prepare_params(params, num_heads)

    out = encoder_block(x, kparams, num_heads=num_heads)
    out = jax.block_until_ready(out)

    ref = _reference(x, params, num_heads)
    assert out.shape == (B, S, D)
    # Loose bound: the kernel uses bf16 matmul operands/weights + approx reciprocal,
    # the reference is pure f32.  Structural bugs would produce O(1) errors.
    err = float(jnp.max(jnp.abs(out - ref)))
    assert err < 1e-1, f"mismatch vs JAX reference: max|err|={err}"

    print("KERNEL_OK")
</pallas_src>

<mosaic_0001>
module attributes {stable_mosaic.version = 11 : i64} {
  func.func @_encoder_block_kernel(%arg0: i32, %arg1: i32, %arg2: memref<1x8x32xf32, #tpu.memory_space<vmem>>, %arg3: memref<32x32xbf16, #tpu.memory_space<vmem>>, %arg4: memref<32x32xbf16, #tpu.memory_space<vmem>>, %arg5: memref<32x32xbf16, #tpu.memory_space<vmem>>, %arg6: memref<1x32xf32, #tpu.memory_space<vmem>>, %arg7: memref<1x32xf32, #tpu.memory_space<vmem>>, %arg8: memref<1x32xf32, #tpu.memory_space<vmem>>, %arg9: memref<32x32xbf16, #tpu.memory_space<vmem>>, %arg10: memref<1x32xf32, #tpu.memory_space<vmem>>, %arg11: memref<32x64xbf16, #tpu.memory_space<vmem>>, %arg12: memref<1x64xf32, #tpu.memory_space<vmem>>, %arg13: memref<64x32xbf16, #tpu.memory_space<vmem>>, %arg14: memref<1x32xf32, #tpu.memory_space<vmem>>, %arg15: memref<1x32xf32, #tpu.memory_space<vmem>>, %arg16: memref<1x32xf32, #tpu.memory_space<vmem>>, %arg17: memref<1x32xf32, #tpu.memory_space<vmem>>, %arg18: memref<1x32xf32, #tpu.memory_space<vmem>>, %arg19: memref<1x8x32xf32, #tpu.memory_space<vmem>>, %arg20: memref<4x8x8xbf16, #tpu.memory_space<vmem>>, %arg21: memref<4x8x8xbf16, #tpu.memory_space<vmem>>, %arg22: memref<4x8x8xbf16, #tpu.memory_space<vmem>>, %arg23: memref<8x32xbf16, #tpu.memory_space<vmem>>) attributes {dimension_semantics = [#tpu.dimension_semantics<parallel>, #tpu.dimension_semantics<arbitrary>], iteration_bounds = array<i64: 2, 1>, scalar_prefetch = 0 : i64, scratch_operands = 4 : i64, tpu.core_type = #tpu.core_type<tc>, window_params = [{transform_indices = @transform_0, window_bounds = array<i64: 1, 8, 32>}, {pipeline_mode = #tpu.pipeline_mode<synchronous>, transform_indices = @transform_1, window_bounds = array<i64: 32, 32>}, {pipeline_mode = #tpu.pipeline_mode<synchronous>, transform_indices = @transform_2, window_bounds = array<i64: 32, 32>}, {pipeline_mode = #tpu.pipeline_mode<synchronous>, transform_indices = @transform_3, window_bounds = array<i64: 32, 32>}, {pipeline_mode = #tpu.pipeline_mode<synchronous>, transform_indices = @transform_4, window_bounds = array<i64: 1, 32>}, {pipeline_mode = #tpu.pipeline_mode<synchronous>, transform_indices = @transform_5, window_bounds = array<i64: 1, 32>}, {pipeline_mode = #tpu.pipeline_mode<synchronous>, transform_indices = @transform_6, window_bounds = array<i64: 1, 32>}, {pipeline_mode = #tpu.pipeline_mode<synchronous>, transform_indices = @transform_7, window_bounds = array<i64: 32, 32>}, {pipeline_mode = #tpu.pipeline_mode<synchronous>, transform_indices = @transform_8, window_bounds = array<i64: 1, 32>}, {pipeline_mode = #tpu.pipeline_mode<synchronous>, transform_indices = @transform_9, window_bounds = array<i64: 32, 64>}, {pipeline_mode = #tpu.pipeline_mode<synchronous>, transform_indices = @transform_10, window_bounds = array<i64: 1, 64>}, {pipeline_mode = #tpu.pipeline_mode<synchronous>, transform_indices = @transform_11, window_bounds = array<i64: 64, 32>}, {pipeline_mode = #tpu.pipeline_mode<synchronous>, transform_indices = @transform_12, window_bounds = array<i64: 1, 32>}, {pipeline_mode = #tpu.pipeline_mode<synchronous>, transform_indices = @transform_13, window_bounds = array<i64: 1, 32>}, {pipeline_mode = #tpu.pipeline_mode<synchronous>, transform_indices = @transform_14, window_bounds = array<i64: 1, 32>}, {pipeline_mode = #tpu.pipeline_mode<synchronous>, transform_indices = @transform_15, window_bounds = array<i64: 1, 32>}, {pipeline_mode = #tpu.pipeline_mode<synchronous>, transform_indices = @transform_16, window_bounds = array<i64: 1, 32>}, {transform_indices = @transform_17, window_bounds = array<i64: 1, 8, 32>}]} {
    %c0_i32 = arith.constant 0 : i32
    %0 = arith.cmpi eq, %arg1, %c0_i32 : i32
    %1 = arith.extui %0 : i1 to i32
    %c0_i32_0 = arith.constant 0 : i32
    %2 = arith.cmpi ne, %1, %c0_i32_0 : i32
    scf.if %2 {
      %c0_73 = arith.constant 0 : index
      %c0_74 = arith.constant 0 : index
      %c0_75 = arith.constant 0 : index
      %141 = vector.load %arg2[%c0_73, %c0_74, %c0_75] : memref<1x8x32xf32, #tpu.memory_space<vmem>>, vector<1x8x32xf32>
      %142 = vector.shape_cast %141 : vector<1x8x32xf32> to vector<8x32xf32>
      %143 = arith.truncf %142 : vector<8x32xf32> to vector<8x32xbf16>
      %c0_76 = arith.constant 0 : index
      %c0_77 = arith.constant 0 : index
      %144 = vector.load %arg4[%c0_76, %c0_77] : memref<32x32xbf16, #tpu.memory_space<vmem>>, vector<32x32xbf16>
      %cst_78 = arith.constant dense<0.000000e+00> : vector<8x32xf32>
      %145 = tpu.matmul %143, %144, %cst_78 {dimension_numbers = #tpu.dot_dimension_numbers<[1], [0], [0], [1], [0, 0, 1, 1], [], []>} : vector<8x32xbf16>, vector<32x32xbf16>, vector<8x32xf32> -> vector<8x32xf32>
      %c0_79 = arith.constant 0 : index
      %c0_80 = arith.constant 0 : index
      %146 = vector.load %arg7[%c0_79, %c0_80] : memref<1x32xf32, #tpu.memory_space<vmem>>, vector<1x32xf32>
      %147 = vector.broadcast %146 : vector<1x32xf32> to vector<8x32xf32>
      %148 = arith.addf %145, %147 : vector<8x32xf32>
      %c0_81 = arith.constant 0 : index
      %c0_82 = arith.constant 0 : index
      %149 = vector.load %arg5[%c0_81, %c0_82] : memref<32x32xbf16, #tpu.memory_space<vmem>>, vector<32x32xbf16>
      %cst_83 = arith.constant dense<0.000000e+00> : vector<8x32xf32>
      %150 = tpu.matmul %143, %149, %cst_83 {dimension_numbers = #tpu.dot_dimension_numbers<[1], [0], [0], [1], [0, 0, 1, 1], [], []>} : vector<8x32xbf16>, vector<32x32xbf16>, vector<8x32xf32> -> vector<8x32xf32>
      %c0_84 = arith.constant 0 : index
      %c0_85 = arith.constant 0 : index
      %151 = vector.load %arg8[%c0_84, %c0_85] : memref<1x32xf32, #tpu.memory_space<vmem>>, vector<1x32xf32>
      %152 = vector.broadcast %151 : vector<1x32xf32> to vector<8x32xf32>
      %153 = arith.addf %150, %152 : vector<8x32xf32>
      %154 = vector.extract_strided_slice %148 {offsets = [0, 0], sizes = [8, 8], strides = [1, 1]} : vector<8x32xf32> to vector<8x8xf32>
      %155 = arith.truncf %154 : vector<8x8xf32> to vector<8x8xbf16>
      %c0_86 = arith.constant 0 : index
      %c0_87 = arith.constant 0 : index
      %c0_88 = arith.constant 0 : index
      %156 = vector.load %arg21[%c0_86, %c0_87, %c0_88] : memref<4x8x8xbf16, #tpu.memory_space<vmem>>, vector<1x8x8xbf16>
      %157 = vector.shape_cast %156 : vector<1x8x8xbf16> to vector<8x8xbf16>
      %158 = vector.shape_cast %155 : vector<8x8xbf16> to vector<1x8x8xbf16>
      tpu.vector_store %arg21[%c0_86, %c0_87, %c0_88], %158 {strides = array<i32>} : memref<4x8x8xbf16, #tpu.memory_space<vmem>>, vector<1x8x8xbf16>,
      %159 = vector.extract_strided_slice %153 {offsets = [0, 0], sizes = [8, 8], strides = [1, 1]} : vector<8x32xf32> to vector<8x8xf32>
      %160 = arith.truncf %159 : vector<8x8xf32> to vector<8x8xbf16>
      %c0_89 = arith.constant 0 : index
      %c0_90 = arith.constant 0 : index
      %c0_91 = arith.constant 0 : index
      %161 = vector.load %arg22[%c0_89, %c0_90, %c0_91] : memref<4x8x8xbf16, #tpu.memory_space<vmem>>, vector<1x8x8xbf16>
      %162 = vector.shape_cast %161 : vector<1x8x8xbf16> to vector<8x8xbf16>
      %163 = vector.shape_cast %160 : vector<8x8xbf16> to vector<1x8x8xbf16>
      tpu.vector_store %arg22[%c0_89, %c0_90, %c0_91], %163 {strides = array<i32>} : memref<4x8x8xbf16, #tpu.memory_space<vmem>>, vector<1x8x8xbf16>,
      %164 = vector.extract_strided_slice %148 {offsets = [0, 8], sizes = [8, 8], strides = [1, 1]} : vector<8x32xf32> to vector<8x8xf32>
      %165 = arith.truncf %164 : vector<8x8xf32> to vector<8x8xbf16>
      %c1_92 = arith.constant 1 : index
      %c0_93 = arith.constant 0 : index
      %c0_94 = arith.constant 0 : index
      %166 = vector.load %arg21[%c1_92, %c0_93, %c0_94] : memref<4x8x8xbf16, #tpu.memory_space<vmem>>, vector<1x8x8xbf16>
      %167 = vector.shape_cast %166 : vector<1x8x8xbf16> to vector<8x8xbf16>
      %168 = vector.shape_cast %165 : vector<8x8xbf16> to vector<1x8x8xbf16>
      tpu.vector_store %arg21[%c1_92, %c0_93, %c0_94], %168 {strides = array<i32>} : memref<4x8x8xbf16, #tpu.memory_space<vmem>>, vector<1x8x8xbf16>,
      %169 = vector.extract_strided_slice %153 {offsets = [0, 8], sizes = [8, 8], strides = [1, 1]} : vector<8x32xf32> to vector<8x8xf32>
      %170 = arith.truncf %169 : vector<8x8xf32> to vector<8x8xbf16>
      %c1_95 = arith.constant 1 : index
      %c0_96 = arith.constant 0 : index
      %c0_97 = arith.constant 0 : index
      %171 = vector.load %arg22[%c1_95, %c0_96, %c0_97] : memref<4x8x8xbf16, #tpu.memory_space<vmem>>, vector<1x8x8xbf16>
      %172 = vector.shape_cast %171 : vector<1x8x8xbf16> to vector<8x8xbf16>
      %173 = vector.shape_cast %170 : vector<8x8xbf16> to vector<1x8x8xbf16>
      tpu.vector_store %arg22[%c1_95, %c0_96, %c0_97], %173 {strides = array<i32>} : memref<4x8x8xbf16, #tpu.memory_space<vmem>>, vector<1x8x8xbf16>,
      %174 = vector.extract_strided_slice %148 {offsets = [0, 16], sizes = [8, 8], strides = [1, 1]} : vector<8x32xf32> to vector<8x8xf32>
      %175 = arith.truncf %174 : vector<8x8xf32> to vector<8x8xbf16>
      %c2_98 = arith.constant 2 : index
      %c0_99 = arith.constant 0 : index
      %c0_100 = arith.constant 0 : index
      %176 = vector.load %arg21[%c2_98, %c0_99, %c0_100] : memref<4x8x8xbf16, #tpu.memory_space<vmem>>, vector<1x8x8xbf16>
      %177 = vector.shape_cast %176 : vector<1x8x8xbf16> to vector<8x8xbf16>
      %178 = vector.shape_cast %175 : vector<8x8xbf16> to vector<1x8x8xbf16>
      tpu.vector_store %arg21[%c2_98, %c0_99, %c0_100], %178 {strides = array<i32>} : memref<4x8x8xbf16, #tpu.memory_space<vmem>>, vector<1x8x8xbf16>,
      %179 = vector.extract_strided_slice %153 {offsets = [0, 16], sizes = [8, 8], strides = [1, 1]} : vector<8x32xf32> to vector<8x8xf32>
      %180 = arith.truncf %179 : vector<8x8xf32> to vector<8x8xbf16>
      %c2_101 = arith.constant 2 : index
      %c0_102 = arith.constant 0 : index
      %c0_103 = arith.constant 0 : index
      %181 = vector.load %arg22[%c2_101, %c0_102, %c0_103] : memref<4x8x8xbf16, #tpu.memory_space<vmem>>, vector<1x8x8xbf16>
      %182 = vector.shape_cast %181 : vector<1x8x8xbf16> to vector<8x8xbf16>
      %183 = vector.shape_cast %180 : vector<8x8xbf16> to vector<1x8x8xbf16>
      tpu.vector_store %arg22[%c2_101, %c0_102, %c0_103], %183 {strides = array<i32>} : memref<4x8x8xbf16, #tpu.memory_space<vmem>>, vector<1x8x8xbf16>,
      %184 = vector.extract_strided_slice %148 {offsets = [0, 24], sizes = [8, 8], strides = [1, 1]} : vector<8x32xf32> to vector<8x8xf32>
      %185 = arith.truncf %184 : vector<8x8xf32> to vector<8x8xbf16>
      %c3_104 = arith.constant 3 : index
      %c0_105 = arith.constant 0 : index
      %c0_106 = arith.constant 0 : index
      %186 = vector.load %arg21[%c3_104, %c0_105, %c0_106] : memref<4x8x8xbf16, #tpu.memory_space<vmem>>, vector<1x8x8xbf16>
      %187 = vector.shape_cast %186 : vector<1x8x8xbf16> to vector<8x8xbf16>
      %188 = vector.shape_cast %185 : vector<8x8xbf16> to vector<1x8x8xbf16>
      tpu.vector_store %arg21[%c3_104, %c0_105, %c0_106], %188 {strides = array<i32>} : memref<4x8x8xbf16, #tpu.memory_space<vmem>>, vector<1x8x8xbf16>,
      %189 = vector.extract_strided_slice %153 {offsets = [0, 24], sizes = [8, 8], strides = [1, 1]} : vector<8x32xf32> to vector<8x8xf32>
      %190 = arith.truncf %189 : vector<8x8xf32> to vector<8x8xbf16>
      %c3_107 = arith.constant 3 : index
      %c0_108 = arith.constant 0 : index
      %c0_109 = arith.constant 0 : index
      %191 = vector.load %arg22[%c3_107, %c0_108, %c0_109] : memref<4x8x8xbf16, #tpu.memory_space<vmem>>, vector<1x8x8xbf16>
      %192 = vector.shape_cast %191 : vector<1x8x8xbf16> to vector<8x8xbf16>
      %193 = vector.shape_cast %190 : vector<8x8xbf16> to vector<1x8x8xbf16>
      tpu.vector_store %arg22[%c3_107, %c0_108, %c0_109], %193 {strides = array<i32>} : memref<4x8x8xbf16, #tpu.memory_space<vmem>>, vector<1x8x8xbf16>,
    } else {
    }
    %c8_i32 = arith.constant 8 : i32
    %3 = arith.muli %arg1, %c8_i32 : i32
    %4 = tpu.assume_multiple %3, 8 : i32
    %c0 = arith.constant 0 : index
    %5 = arith.index_cast %4 : i32 to index
    %c0_1 = arith.constant 0 : index
    %6 = vector.load %arg2[%c0, %5, %c0_1] : memref<1x8x32xf32, #tpu.memory_space<vmem>>, vector<1x8x32xf32>
    %7 = vector.shape_cast %6 : vector<1x8x32xf32> to vector<8x32xf32>
    %8 = arith.truncf %7 : vector<8x32xf32> to vector<8x32xbf16>
    %c0_2 = arith.constant 0 : index
    %c0_3 = arith.constant 0 : index
    %9 = vector.load %arg3[%c0_2, %c0_3] : memref<32x32xbf16, #tpu.memory_space<vmem>>, vector<32x32xbf16>
    %cst = arith.constant dense<0.000000e+00> : vector<8x32xf32>
    %10 = tpu.matmul %8, %9, %cst {dimension_numbers = #tpu.dot_dimension_numbers<[1], [0], [0], [1], [0, 0, 1, 1], [], []>} : vector<8x32xbf16>, vector<32x32xbf16>, vector<8x32xf32> -> vector<8x32xf32>
    %c0_4 = arith.constant 0 : index
    %c0_5 = arith.constant 0 : index
    %11 = vector.load %arg6[%c0_4, %c0_5] : memref<1x32xf32, #tpu.memory_space<vmem>>, vector<1x32xf32>
    %12 = vector.broadcast %11 : vector<1x32xf32> to vector<8x32xf32>
    %13 = arith.addf %10, %12 : vector<8x32xf32>
    %14 = vector.extract_strided_slice %13 {offsets = [0, 0], sizes = [8, 8], strides = [1, 1]} : vector<8x32xf32> to vector<8x8xf32>
    %15 = arith.truncf %14 : vector<8x8xf32> to vector<8x8xbf16>
    %c0_6 = arith.constant 0 : index
    %c0_7 = arith.constant 0 : index
    %c0_8 = arith.constant 0 : index
    %16 = vector.load %arg20[%c0_6, %c0_7, %c0_8] : memref<4x8x8xbf16, #tpu.memory_space<vmem>>, vector<1x8x8xbf16>
    %17 = vector.shape_cast %16 : vector<1x8x8xbf16> to vector<8x8xbf16>
    %18 = vector.shape_cast %15 : vector<8x8xbf16> to vector<1x8x8xbf16>
    tpu.vector_store %arg20[%c0_6, %c0_7, %c0_8], %18 {strides = array<i32>} : memref<4x8x8xbf16, #tpu.memory_space<vmem>>, vector<1x8x8xbf16>,
    %19 = vector.extract_strided_slice %13 {offsets = [0, 8], sizes = [8, 8], strides = [1, 1]} : vector<8x32xf32> to vector<8x8xf32>
    %20 = arith.truncf %19 : vector<8x8xf32> to vector<8x8xbf16>
    %c1 = arith.constant 1 : index
    %c0_9 = arith.constant 0 : index
    %c0_10 = arith.constant 0 : index
    %21 = vector.load %arg20[%c1, %c0_9, %c0_10] : memref<4x8x8xbf16, #tpu.memory_space<vmem>>, vector<1x8x8xbf16>
    %22 = vector.shape_cast %21 : vector<1x8x8xbf16> to vector<8x8xbf16>
    %23 = vector.shape_cast %20 : vector<8x8xbf16> to vector<1x8x8xbf16>
    tpu.vector_store %arg20[%c1, %c0_9, %c0_10], %23 {strides = array<i32>} : memref<4x8x8xbf16, #tpu.memory_space<vmem>>, vector<1x8x8xbf16>,
    %24 = vector.extract_strided_slice %13 {offsets = [0, 16], sizes = [8, 8], strides = [1, 1]} : vector<8x32xf32> to vector<8x8xf32>
    %25 = arith.truncf %24 : vector<8x8xf32> to vector<8x8xbf16>
    %c2 = arith.constant 2 : index
    %c0_11 = arith.constant 0 : index
    %c0_12 = arith.constant 0 : index
    %26 = vector.load %arg20[%c2, %c0_11, %c0_12] : memref<4x8x8xbf16, #tpu.memory_space<vmem>>, vector<1x8x8xbf16>
    %27 = vector.shape_cast %26 : vector<1x8x8xbf16> to vector<8x8xbf16>
    %28 = vector.shape_cast %25 : vector<8x8xbf16> to vector<1x8x8xbf16>
    tpu.vector_store %arg20[%c2, %c0_11, %c0_12], %28 {strides = array<i32>} : memref<4x8x8xbf16, #tpu.memory_space<vmem>>, vector<1x8x8xbf16>,
    %29 = vector.extract_strided_slice %13 {offsets = [0, 24], sizes = [8, 8], strides = [1, 1]} : vector<8x32xf32> to vector<8x8xf32>
    %30 = arith.truncf %29 : vector<8x8xf32> to vector<8x8xbf16>
    %c3 = arith.constant 3 : index
    %c0_13 = arith.constant 0 : index
    %c0_14 = arith.constant 0 : index
    %31 = vector.load %arg20[%c3, %c0_13, %c0_14] : memref<4x8x8xbf16, #tpu.memory_space<vmem>>, vector<1x8x8xbf16>
    %32 = vector.shape_cast %31 : vector<1x8x8xbf16> to vector<8x8xbf16>
    %33 = vector.shape_cast %30 : vector<8x8xbf16> to vector<1x8x8xbf16>
    tpu.vector_store %arg20[%c3, %c0_13, %c0_14], %33 {strides = array<i32>} : memref<4x8x8xbf16, #tpu.memory_space<vmem>>, vector<1x8x8xbf16>,
    %c0_15 = arith.constant 0 : index
    %c0_16 = arith.constant 0 : index
    %c0_17 = arith.constant 0 : index
    %34 = vector.load %arg20[%c0_15, %c0_16, %c0_17] : memref<4x8x8xbf16, #tpu.memory_space<vmem>>, vector<4x8x8xbf16>
    %c0_18 = arith.constant 0 : index
    %c0_19 = arith.constant 0 : index
    %c0_20 = arith.constant 0 : index
    %35 = vector.load %arg21[%c0_18, %c0_19, %c0_20] : memref<4x8x8xbf16, #tpu.memory_space<vmem>>, vector<4x8x8xbf16>
    "tpu.trace_start"() <{level = 10 : i32, message = "hqd,hkd->hqk"}> : () -> ()
    %cst_21 = arith.constant dense<0.000000e+00> : vector<4x8x8xf32>
    %36 = tpu.matmul %34, %35, %cst_21 {dimension_numbers = #tpu.dot_dimension_numbers<[2], [2], [1], [1], [0, 0, 0, 1, 1, 1], [0], [0]>} : vector<4x8x8xbf16>, vector<4x8x8xbf16>, vector<4x8x8xf32> -> vector<4x8x8xf32>
    "tpu.trace_stop"() : () -> ()
    %cst_22 = arith.constant 0.353553385 : f32
    %37 = vector.broadcast %cst_22 : f32 to vector<4x8x8xf32>
    %38 = arith.mulf %36, %37 : vector<4x8x8xf32>
    %cst_23 = arith.constant dense<0xFF800000> : vector<4x8xf32>
    %39 = vector.multi_reduction <maximumf>, %38, %cst_23 [2] : vector<4x8x8xf32> to vector<4x8xf32>
    %40 = vector.shape_cast %39 : vector<4x8xf32> to vector<4x8x1xf32>
    %41 = vector.broadcast %40 : vector<4x8x1xf32> to vector<4x8x8xf32>
    %42 = arith.subf %38, %41 : vector<4x8x8xf32>
    %43 = math.exp %42 : vector<4x8x8xf32>
    %cst_24 = arith.constant dense<0.000000e+00> : vector<4x8xf32>
    %44 = vector.multi_reduction <add>, %43, %cst_24 [2] : vector<4x8x8xf32> to vector<4x8xf32>
    %45 = vector.shape_cast %44 : vector<4x8xf32> to vector<4x8x1xf32>
    %46 = tpu.reciprocal %45 {approx = true} : vector<4x8x1xf32> -> vector<4x8x1xf32>
    %47 = vector.broadcast %46 : vector<4x8x1xf32> to vector<4x8x8xf32>
    %48 = arith.mulf %43, %47 : vector<4x8x8xf32>
    %49 = arith.truncf %48 : vector<4x8x8xf32> to vector<4x8x8xbf16>
    %c0_25 = arith.constant 0 : index
    %c0_26 = arith.constant 0 : index
    %c0_27 = arith.constant 0 : index
    %50 = vector.load %arg22[%c0_25, %c0_26, %c0_27] : memref<4x8x8xbf16, #tpu.memory_space<vmem>>, vector<4x8x8xbf16>
    "tpu.trace_start"() <{level = 10 : i32, message = "hqk,hkd->hqd"}> : () -> ()
    %cst_28 = arith.constant dense<0.000000e+00> : vector<4x8x8xf32>
    %51 = tpu.matmul %49, %50, %cst_28 {dimension_numbers = #tpu.dot_dimension_numbers<[2], [1], [1], [2], [0, 0, 0, 1, 1, 2], [0], [0]>} : vector<4x8x8xbf16>, vector<4x8x8xbf16>, vector<4x8x8xf32> -> vector<4x8x8xf32>
    "tpu.trace_stop"() : () -> ()
    %52 = vector.extract_strided_slice %51 {offsets = [0, 0, 0], sizes = [1, 8, 8], strides = [1, 1, 1]} : vector<4x8x8xf32> to vector<1x8x8xf32>
    %53 = vector.shape_cast %52 : vector<1x8x8xf32> to vector<8x8xf32>
    %54 = arith.truncf %53 : vector<8x8xf32> to vector<8x8xbf16>
    %c0_29 = arith.constant 0 : index
    %c0_30 = arith.constant 0 : index
    %55 = vector.load %arg23[%c0_29, %c0_30] : memref<8x32xbf16, #tpu.memory_space<vmem>>, vector<8x8xbf16>
    tpu.vector_store %arg23[%c0_29, %c0_30], %54 {strides = array<i32>} : memref<8x32xbf16, #tpu.memory_space<vmem>>, vector<8x8xbf16>,
    %56 = vector.extract_strided_slice %51 {offsets = [1, 0, 0], sizes = [1, 8, 8], strides = [1, 1, 1]} : vector<4x8x8xf32> to vector<1x8x8xf32>
    %57 = vector.shape_cast %56 : vector<1x8x8xf32> to vector<8x8xf32>
    %58 = arith.truncf %57 : vector<8x8xf32> to vector<8x8xbf16>
    %c0_31 = arith.constant 0 : index
    %c8 = arith.constant 8 : index
    %59 = vector.load %arg23[%c0_31, %c8] : memref<8x32xbf16, #tpu.memory_space<vmem>>, vector<8x8xbf16>
    tpu.vector_store %arg23[%c0_31, %c8], %58 {strides = array<i32>} : memref<8x32xbf16, #tpu.memory_space<vmem>>, vector<8x8xbf16>,
    %60 = vector.extract_strided_slice %51 {offsets = [2, 0, 0], sizes = [1, 8, 8], strides = [1, 1, 1]} : vector<4x8x8xf32> to vector<1x8x8xf32>
    %61 = vector.shape_cast %60 : vector<1x8x8xf32> to vector<8x8xf32>
    %62 = arith.truncf %61 : vector<8x8xf32> to vector<8x8xbf16>
    %c0_32 = arith.constant 0 : index
    %c16 = arith.constant 16 : index
    %63 = vector.load %arg23[%c0_32, %c16] : memref<8x32xbf16, #tpu.memory_space<vmem>>, vector<8x8xbf16>
    tpu.vector_store %arg23[%c0_32, %c16], %62 {strides = array<i32>} : memref<8x32xbf16, #tpu.memory_space<vmem>>, vector<8x8xbf16>,
    %64 = vector.extract_strided_slice %51 {offsets = [3, 0, 0], sizes = [1, 8, 8], strides = [1, 1, 1]} : vector<4x8x8xf32> to vector<1x8x8xf32>
    %65 = vector.shape_cast %64 : vector<1x8x8xf32> to vector<8x8xf32>
    %66 = arith.truncf %65 : vector<8x8xf32> to vector<8x8xbf16>
    %c0_33 = arith.constant 0 : index
    %c24 = arith.constant 24 : index
    %67 = vector.load %arg23[%c0_33, %c24] : memref<8x32xbf16, #tpu.memory_space<vmem>>, vector<8x8xbf16>
    tpu.vector_store %arg23[%c0_33, %c24], %66 {strides = array<i32>} : memref<8x32xbf16, #tpu.memory_space<vmem>>, vector<8x8xbf16>,
    %c0_34 = arith.constant 0 : index
    %c0_35 = arith.constant 0 : index
    %68 = vector.load %arg23[%c0_34, %c0_35] : memref<8x32xbf16, #tpu.memory_space<vmem>>, vector<8x32xbf16>
    %c0_36 = arith.constant 0 : index
    %c0_37 = arith.constant 0 : index
    %69 = vector.load %arg9[%c0_36, %c0_37] : memref<32x32xbf16, #tpu.memory_space<vmem>>, vector<32x32xbf16>
    %cst_38 = arith.constant dense<0.000000e+00> : vector<8x32xf32>
    %70 = tpu.matmul %68, %69, %cst_38 {dimension_numbers = #tpu.dot_dimension_numbers<[1], [0], [0], [1], [0, 0, 1, 1], [], []>} : vector<8x32xbf16>, vector<32x32xbf16>, vector<8x32xf32> -> vector<8x32xf32>
    %c0_39 = arith.constant 0 : index
    %c0_40 = arith.constant 0 : index
    %71 = vector.load %arg10[%c0_39, %c0_40] : memref<1x32xf32, #tpu.memory_space<vmem>>, vector<1x32xf32>
    %72 = vector.broadcast %71 : vector<1x32xf32> to vector<8x32xf32>
    %73 = arith.addf %70, %72 : vector<8x32xf32>
    %74 = arith.addf %7, %73 : vector<8x32xf32>
    %c0_41 = arith.constant 0 : index
    %c0_42 = arith.constant 0 : index
    %75 = vector.load %arg15[%c0_41, %c0_42] : memref<1x32xf32, #tpu.memory_space<vmem>>, vector<1x32xf32>
    %c0_43 = arith.constant 0 : index
    %c0_44 = arith.constant 0 : index
    %76 = vector.load %arg16[%c0_43, %c0_44] : memref<1x32xf32, #tpu.memory_space<vmem>>, vector<1x32xf32>
    %cst_45 = arith.constant dense<0.000000e+00> : vector<8xf32>
    %77 = vector.multi_reduction <add>, %74, %cst_45 [1] : vector<8x32xf32> to vector<8xf32>
    %78 = vector.shape_cast %77 : vector<8xf32> to vector<8x1xf32>
    %cst_46 = arith.constant 3.200000e+01 : f32
    %79 = vector.broadcast %cst_46 : f32 to vector<8x1xf32>
    %80 = arith.divf %78, %79 : vector<8x1xf32>
    %81 = vector.broadcast %80 : vector<8x1xf32> to vector<8x32xf32>
    %82 = arith.subf %74, %81 : vector<8x32xf32>
    %83 = arith.mulf %82, %82 : vector<8x32xf32>
    %cst_47 = arith.constant dense<0.000000e+00> : vector<8xf32>
    %84 = vector.multi_reduction <add>, %83, %cst_47 [1] : vector<8x32xf32> to vector<8xf32>
    %85 = vector.shape_cast %84 : vector<8xf32> to vector<8x1xf32>
    %cst_48 = arith.constant 3.200000e+01 : f32
    %86 = vector.broadcast %cst_48 : f32 to vector<8x1xf32>
    %87 = arith.divf %85, %86 : vector<8x1xf32>
    %88 = vector.broadcast %80 : vector<8x1xf32> to vector<8x32xf32>
    %89 = arith.subf %74, %88 : vector<8x32xf32>
    %cst_49 = arith.constant 9.99999974E-6 : f32
    %90 = vector.broadcast %cst_49 : f32 to vector<8x1xf32>
    %91 = arith.addf %87, %90 : vector<8x1xf32>
    %92 = math.rsqrt %91 : vector<8x1xf32>
    %93 = vector.broadcast %92 : vector<8x1xf32> to vector<8x32xf32>
    %94 = arith.mulf %89, %93 : vector<8x32xf32>
    %95 = vector.broadcast %75 : vector<1x32xf32> to vector<8x32xf32>
    %96 = arith.mulf %94, %95 : vector<8x32xf32>
    %97 = vector.broadcast %76 : vector<1x32xf32> to vector<8x32xf32>
    %98 = arith.addf %96, %97 : vector<8x32xf32>
    %99 = arith.truncf %98 : vector<8x32xf32> to vector<8x32xbf16>
    %c0_50 = arith.constant 0 : index
    %c0_51 = arith.constant 0 : index
    %100 = vector.load %arg11[%c0_50, %c0_51] : memref<32x64xbf16, #tpu.memory_space<vmem>>, vector<32x64xbf16>
    %cst_52 = arith.constant dense<0.000000e+00> : vector<8x64xf32>
    %101 = tpu.matmul %99, %100, %cst_52 {dimension_numbers = #tpu.dot_dimension_numbers<[1], [0], [0], [1], [0, 0, 1, 1], [], []>} : vector<8x32xbf16>, vector<32x64xbf16>, vector<8x64xf32> -> vector<8x64xf32>
    %c0_53 = arith.constant 0 : index
    %c0_54 = arith.constant 0 : index
    %102 = vector.load %arg12[%c0_53, %c0_54] : memref<1x64xf32, #tpu.memory_space<vmem>>, vector<1x64xf32>
    %103 = vector.broadcast %102 : vector<1x64xf32> to vector<8x64xf32>
    %104 = arith.addf %101, %103 : vector<8x64xf32>
    %cst_55 = arith.constant 0.000000e+00 : f32
    %105 = vector.broadcast %cst_55 : f32 to vector<8x64xf32>
    %106 = arith.maximumf %104, %105 : vector<8x64xf32>
    %107 = arith.truncf %106 : vector<8x64xf32> to vector<8x64xbf16>
    %c0_56 = arith.constant 0 : index
    %c0_57 = arith.constant 0 : index
    %108 = vector.load %arg13[%c0_56, %c0_57] : memref<64x32xbf16, #tpu.memory_space<vmem>>, vector<64x32xbf16>
    %cst_58 = arith.constant dense<0.000000e+00> : vector<8x32xf32>
    %109 = tpu.matmul %107, %108, %cst_58 {dimension_numbers = #tpu.dot_dimension_numbers<[1], [0], [0], [1], [0, 0, 1, 1], [], []>} : vector<8x64xbf16>, vector<64x32xbf16>, vector<8x32xf32> -> vector<8x32xf32>
    %c0_59 = arith.constant 0 : index
    %c0_60 = arith.constant 0 : index
    %110 = vector.load %arg14[%c0_59, %c0_60] : memref<1x32xf32, #tpu.memory_space<vmem>>, vector<1x32xf32>
    %111 = vector.broadcast %110 : vector<1x32xf32> to vector<8x32xf32>
    %112 = arith.addf %109, %111 : vector<8x32xf32>
    %113 = arith.addf %98, %112 : vector<8x32xf32>
    %c0_61 = arith.constant 0 : index
    %c0_62 = arith.constant 0 : index
    %114 = vector.load %arg17[%c0_61, %c0_62] : memref<1x32xf32, #tpu.memory_space<vmem>>, vector<1x32xf32>
    %c0_63 = arith.constant 0 : index
    %c0_64 = arith.constant 0 : index
    %115 = vector.load %arg18[%c0_63, %c0_64] : memref<1x32xf32, #tpu.memory_space<vmem>>, vector<1x32xf32>
    %cst_65 = arith.constant dense<0.000000e+00> : vector<8xf32>
    %116 = vector.multi_reduction <add>, %113, %cst_65 [1] : vector<8x32xf32> to vector<8xf32>
    %117 = vector.shape_cast %116 : vector<8xf32> to vector<8x1xf32>
    %cst_66 = arith.constant 3.200000e+01 : f32
    %118 = vector.broadcast %cst_66 : f32 to vector<8x1xf32>
    %119 = arith.divf %117, %118 : vector<8x1xf32>
    %120 = vector.broadcast %119 : vector<8x1xf32> to vector<8x32xf32>
    %121 = arith.subf %113, %120 : vector<8x32xf32>
    %122 = arith.mulf %121, %121 : vector<8x32xf32>
    %cst_67 = arith.constant dense<0.000000e+00> : vector<8xf32>
    %123 = vector.multi_reduction <add>, %122, %cst_67 [1] : vector<8x32xf32> to vector<8xf32>
    %124 = vector.shape_cast %123 : vector<8xf32> to vector<8x1xf32>
    %cst_68 = arith.constant 3.200000e+01 : f32
    %125 = vector.broadcast %cst_68 : f32 to vector<8x1xf32>
    %126 = arith.divf %124, %125 : vector<8x1xf32>
    %127 = vector.broadcast %119 : vector<8x1xf32> to vector<8x32xf32>
    %128 = arith.subf %113, %127 : vector<8x32xf32>
    %cst_69 = arith.constant 9.99999974E-6 : f32
    %129 = vector.broadcast %cst_69 : f32 to vector<8x1xf32>
    %130 = arith.addf %126, %129 : vector<8x1xf32>
    %131 = math.rsqrt %130 : vector<8x1xf32>
    %132 = vector.broadcast %131 : vector<8x1xf32> to vector<8x32xf32>
    %133 = arith.mulf %128, %132 : vector<8x32xf32>
    %134 = vector.broadcast %114 : vector<1x32xf32> to vector<8x32xf32>
    %135 = arith.mulf %133, %134 : vector<8x32xf32>
    %136 = vector.broadcast %115 : vector<1x32xf32> to vector<8x32xf32>
    %137 = arith.addf %135, %136 : vector<8x32xf32>
    %c0_70 = arith.constant 0 : index
    %c0_71 = arith.constant 0 : index
    %c0_72 = arith.constant 0 : index
    %138 = vector.load %arg19[%c0_70, %c0_71, %c0_72] : memref<1x8x32xf32, #tpu.memory_space<vmem>>, vector<1x8x32xf32>
    %139 = vector.shape_cast %138 : vector<1x8x32xf32> to vector<8x32xf32>
    %140 = vector.shape_cast %137 : vector<8x32xf32> to vector<1x8x32xf32>
    tpu.vector_store %arg19[%c0_70, %c0_71, %c0_72], %140 {strides = array<i32>} : memref<1x8x32xf32, #tpu.memory_space<vmem>>, vector<1x8x32xf32>,
    return
  }
  func.func @transform_0(%arg0: i32, %arg1: i32) -> (i32, i32, i32) {
    %c0_i32 = arith.constant 0 : i32
    %c0_i32_0 = arith.constant 0 : i32
    %c0_i32_1 = arith.constant 0 : i32
    return %arg0, %c0_i32, %c0_i32_0 : i32, i32, i32
  }
  func.func @transform_1(%arg0: i32, %arg1: i32) -> (i32, i32) {
    %c0_i32 = arith.constant 0 : i32
    %c0_i32_0 = arith.constant 0 : i32
    %c0_i32_1 = arith.constant 0 : i32
    return %c0_i32, %c0_i32_0 : i32, i32
  }
  func.func @transform_2(%arg0: i32, %arg1: i32) -> (i32, i32) {
    %c0_i32 = arith.constant 0 : i32
    %c0_i32_0 = arith.constant 0 : i32
    %c0_i32_1 = arith.constant 0 : i32
    return %c0_i32, %c0_i32_0 : i32, i32
  }
  func.func @transform_3(%arg0: i32, %arg1: i32) -> (i32, i32) {
    %c0_i32 = arith.constant 0 : i32
    %c0_i32_0 = arith.constant 0 : i32
    %c0_i32_1 = arith.constant 0 : i32
    return %c0_i32, %c0_i32_0 : i32, i32
  }
  func.func @transform_4(%arg0: i32, %arg1: i32) -> (i32, i32) {
    %c0_i32 = arith.constant 0 : i32
    %c0_i32_0 = arith.constant 0 : i32
    %c0_i32_1 = arith.constant 0 : i32
    return %c0_i32, %c0_i32_0 : i32, i32
  }
  func.func @transform_5(%arg0: i32, %arg1: i32) -> (i32, i32) {
    %c0_i32 = arith.constant 0 : i32
    %c0_i32_0 = arith.constant 0 : i32
    %c0_i32_1 = arith.constant 0 : i32
    return %c0_i32, %c0_i32_0 : i32, i32
  }
  func.func @transform_6(%arg0: i32, %arg1: i32) -> (i32, i32) {
    %c0_i32 = arith.constant 0 : i32
    %c0_i32_0 = arith.constant 0 : i32
    %c0_i32_1 = arith.constant 0 : i32
    return %c0_i32, %c0_i32_0 : i32, i32
  }
  func.func @transform_7(%arg0: i32, %arg1: i32) -> (i32, i32) {
    %c0_i32 = arith.constant 0 : i32
    %c0_i32_0 = arith.constant 0 : i32
    %c0_i32_1 = arith.constant 0 : i32
    return %c0_i32, %c0_i32_0 : i32, i32
  }
  func.func @transform_8(%arg0: i32, %arg1: i32) -> (i32, i32) {
    %c0_i32 = arith.constant 0 : i32
    %c0_i32_0 = arith.constant 0 : i32
    %c0_i32_1 = arith.constant 0 : i32
    return %c0_i32, %c0_i32_0 : i32, i32
  }
  func.func @transform_9(%arg0: i32, %arg1: i32) -> (i32, i32) {
    %c0_i32 = arith.constant 0 : i32
    %c0_i32_0 = arith.constant 0 : i32
    %c0_i32_1 = arith.constant 0 : i32
    return %c0_i32, %c0_i32_0 : i32, i32
  }
  func.func @transform_10(%arg0: i32, %arg1: i32) -> (i32, i32) {
    %c0_i32 = arith.constant 0 : i32
    %c0_i32_0 = arith.constant 0 : i32
    %c0_i32_1 = arith.constant 0 : i32
    return %c0_i32, %c0_i32_0 : i32, i32
  }
  func.func @transform_11(%arg0: i32, %arg1: i32) -> (i32, i32) {
    %c0_i32 = arith.constant 0 : i32
    %c0_i32_0 = arith.constant 0 : i32
    %c0_i32_1 = arith.constant 0 : i32
    return %c0_i32, %c0_i32_0 : i32, i32
  }
  func.func @transform_12(%arg0: i32, %arg1: i32) -> (i32, i32) {
    %c0_i32 = arith.constant 0 : i32
    %c0_i32_0 = arith.constant 0 : i32
    %c0_i32_1 = arith.constant 0 : i32
    return %c0_i32, %c0_i32_0 : i32, i32
  }
  func.func @transform_13(%arg0: i32, %arg1: i32) -> (i32, i32) {
    %c0_i32 = arith.constant 0 : i32
    %c0_i32_0 = arith.constant 0 : i32
    %c0_i32_1 = arith.constant 0 : i32
    return %c0_i32, %c0_i32_0 : i32, i32
  }
  func.func @transform_14(%arg0: i32, %arg1: i32) -> (i32, i32) {
    %c0_i32 = arith.constant 0 : i32
    %c0_i32_0 = arith.constant 0 : i32
    %c0_i32_1 = arith.constant 0 : i32
    return %c0_i32, %c0_i32_0 : i32, i32
  }
  func.func @transform_15(%arg0: i32, %arg1: i32) -> (i32, i32) {
    %c0_i32 = arith.constant 0 : i32
    %c0_i32_0 = arith.constant 0 : i32
    %c0_i32_1 = arith.constant 0 : i32
    return %c0_i32, %c0_i32_0 : i32, i32
  }
  func.func @transform_16(%arg0: i32, %arg1: i32) -> (i32, i32) {
    %c0_i32 = arith.constant 0 : i32
    %c0_i32_0 = arith.constant 0 : i32
    %c0_i32_1 = arith.constant 0 : i32
    return %c0_i32, %c0_i32_0 : i32, i32
  }
  func.func @transform_17(%arg0: i32, %arg1: i32) -> (i32, i32, i32) {
    %c0_i32 = arith.constant 0 : i32
    %c0_i32_0 = arith.constant 0 : i32
    return %arg0, %arg1, %c0_i32 : i32, i32, i32
  }
}

</mosaic_0001>

<llo_original>
// kernel: tpu_custom_call.1
$region0: #{tpu_custom_call.1}
  #allocation0 [shape = 'u32[]', space=smem, size = 0x4, offset = 0x4, fixed_abs, tag = 'smem constant byte address 0x4 - core index']
  #allocation1 [shape = 'u32[144,128]{1,0:T(1,128)}', space=vmem, size = 0x12000, scoped, tag = 'internal scratch']
  #allocation2 [shape = 'bf16[4,8,8]{2,1,0:T(8,128)(2,1)}', space=vmem, size = 0x2000, scoped, tag = 'scratch operand']
  #allocation3 [shape = 'bf16[4,8,8]{2,1,0:T(8,128)(2,1)}', space=vmem, size = 0x2000, scoped, tag = 'scratch operand']
  #allocation4 [shape = 'bf16[4,8,8]{2,1,0:T(8,128)(2,1)}', space=vmem, size = 0x2000, scoped, tag = 'scratch operand']
  #allocation5 [shape = 'bf16[8,32]{1,0:T(8,128)(2,1)}', space=vmem, size = 0x800, scoped, tag = 'scratch operand']
  %s0 = inlined_call_operand.vmem [shape: f32[2,8,32], index: 0, kind: input, shape index: {}]
  %s1 = inlined_call_operand.vmem [shape: bf16[32,32], index: 1, kind: input, shape index: {}]
  %s2 = inlined_call_operand.vmem [shape: bf16[32,32], index: 2, kind: input, shape index: {}]
  %s3 = inlined_call_operand.hbm [shape: bf16[32,32], index: 3, kind: input, shape index: {}]
  %s4 = inlined_call_operand.vmem [shape: f32[1,32], index: 4, kind: input, shape index: {}]
  %s5 = inlined_call_operand.vmem [shape: f32[1,32], index: 5, kind: input, shape index: {}]
  %s6 = inlined_call_operand.hbm [shape: f32[1,32], index: 6, kind: input, shape index: {}]
  %s7 = inlined_call_operand.hbm [shape: bf16[32,32], index: 7, kind: input, shape index: {}]
  %s8 = inlined_call_operand.hbm [shape: f32[1,32], index: 8, kind: input, shape index: {}]
  %s9 = inlined_call_operand.vmem [shape: bf16[32,64], index: 9, kind: input, shape index: {}]
  %s10 = inlined_call_operand.vmem [shape: f32[1,64], index: 10, kind: input, shape index: {}]
  %s11 = inlined_call_operand.vmem [shape: bf16[64,32], index: 11, kind: input, shape index: {}]
  %s12 = inlined_call_operand.vmem [shape: f32[1,32], index: 12, kind: input, shape index: {}]
  %s13 = inlined_call_operand.vmem [shape: f32[1,32], index: 13, kind: input, shape index: {}]
  %s14 = inlined_call_operand.vmem [shape: f32[1,32], index: 14, kind: input, shape index: {}]
  %s15 = inlined_call_operand.vmem [shape: f32[1,32], index: 15, kind: input, shape index: {}]
  %s16 = inlined_call_operand.vmem [shape: f32[1,32], index: 16, kind: input, shape index: {}]
  %s17 = inlined_call_operand.hbm [shape: f32[2,8,32], index: 17, kind: output, shape index: {}]
  %s18 = sld [smem:[#allocation0]]
  $region121: #{tpu_custom_call.1} parent=0
    _
  %s20 = ssub.s32 1, %s18
  %s21 = scalar_select 0, %s20, %s18
  $region1: #{tpu_custom_call.1} parent=0
    #allocation6 [shape = 'u8[8192]{0}', space=vmem, size = 0x2000, scoped, tag = 'input window, operand 3, single buffered']
    #allocation7 [shape = 's32[2]{0}', space=sflag, size = 0x8, scoped, tag = 'scoped memory for tpu_custom_call.1']
    #allocation8 [shape = 's32[2]{0}', space=sflag, size = 0x8, scoped, tag = 'scoped memory for tpu_custom_call.1']
    #allocation9 [shape = 'u8[512]{0}', space=vmem, size = 0x400, scoped, tag = 'input window, operand 6, single buffered']
    #allocation10 [shape = 's32[1]{0}', space=sflag, size = 0x4, scoped, tag = 'scoped memory for tpu_custom_call.1']
    #allocation11 [shape = 'u8[8192]{0}', space=vmem, size = 0x2000, scoped, tag = 'input window, operand 7, single buffered']
    #allocation12 [shape = 'u8[512]{0}', space=vmem, size = 0x400, scoped, tag = 'input window, operand 8, single buffered']
    #allocation13 [shape = 's32[1]{0}', space=sflag, size = 0x4, scoped, tag = 'scoped memory for tpu_custom_call.1']
    #allocation14 [shape = 'u8[8192]{0}', space=vmem, size = 0x2000, scoped, tag = 'output window, operand 0']
    %22 = vsyncpa [#allocation7], 0
    %23 = vsyncpa [#allocation10], 0
    %24 = vsyncpa [#allocation13], 0
    %25 = vsyncpa [#allocation8], 0
    %s26 = scalar_lea.sflag [#allocation8], 1
    %27 = vsyncpa %s26, 0
    loop: start=0, step=1, limit=4
    $region2: #{tpu_custom_call.1} parent=1 // loop_pre_header
      _
    $region3: #{tpu_custom_call.1} parent=1 // loop_header
      %s29 = sphi 0, %s33
      %p30 = scmp.ge.s32.totalorder %s29, 4
      %s36 = sphi 0, %s48
      %s37 = sphi 0, %s44
      %s38 = sphi 0, %s36
      %s39 = sphi 0, %s37
      %s40 = sphi 0, %s38
      %s41 = sphi 0, %s39
      %s51 = sphi 0, %s53
      %s54 = sphi 0, %s51
      %s55 = sphi 0, %s54
      %s71 = sphi 0, %s55
      %s75 = sphi 0, %s75
      %s77 = sphi 0, %s75
      %s78 = sphi 0, %s77
      %s92 = sphi 0, %s78
      %s96 = sphi 0, %s96
      %s98 = sphi 0, %s96
      %s99 = sphi 0, %s98
      %s113 = sphi 0, %s99
      %s117 = sphi 0, %s117
      %s119 = sphi 0, %s117
      %s120 = sphi 0, %s119
      %s134 = sphi 0, %s120
      %s138 = sphi 0, %s138
      %s140 = sphi 0, %s138
      %s141 = sphi 0, %s140
      %s155 = sphi 0, %s141
      %s159 = sphi 0, %s159
      %s161 = sphi 0, %s159
      %s162 = sphi 0, %s161
      %s176 = sphi 0, %s162
      %s180 = sphi 0, %s180
      %s182 = sphi 0, %s180
      %s183 = sphi 0, %s182
      %s197 = sphi 0, %s183
      %s201 = sphi 0, %s201
      %s203 = sphi 0, %s201
      %s204 = sphi 0, %s203
      %s218 = sphi 0, %s204
      %s222 = sphi 0, %s222
      %s224 = sphi 0, %s222
      %s225 = sphi 0, %s224
      %s239 = sphi 0, %s225
      %s243 = sphi 0, %s243
      %s245 = sphi 0, %s243
      %s246 = sphi 0, %s245
      %s260 = sphi 0, %s246
      %s264 = sphi 0, %s264
      %s266 = sphi 0, %s264
      %s267 = sphi 0, %s266
      %s281 = sphi 0, %s267
      %s285 = sphi 0, %s285
      %s287 = sphi 0, %s285
      %s288 = sphi 0, %s287
      %s302 = sphi 0, %s288
      %s306 = sphi 0, %s306
      %s308 = sphi 0, %s306
      %s309 = sphi 0, %s308
      %s323 = sphi 0, %s309
      %s327 = sphi 0, %s327
      %s329 = sphi 0, %s327
      %s330 = sphi 0, %s329
      %s344 = sphi 0, %s330
      %s348 = sphi 0, %s348
      %s350 = sphi 0, %s348
      %s351 = sphi 0, %s350
      %s365 = sphi 0, %s351
      %s369 = sphi 0, %s369
      %s371 = sphi 0, %s369
      %s372 = sphi 0, %s371
      %s386 = sphi 0, %s372
      %s390 = sphi 0, %s390
      %s392 = sphi 0, %s390
      %s393 = sphi 0, %s392
      %s407 = sphi 0, %s393
      %s415 = sphi 0, %s417
      %s418 = sphi 0, %s415
      %s419 = sphi 0, %s418
      %s435 = sphi 0, %s419
    $region4: #{tpu_custom_call.1} parent=1 // loop_header_branch
      %32 = sbr.rel (%p30) target = $region8
    $region5: #{tpu_custom_call.1} parent=1 // loop_body
      %s34 = ssub.s32 %s29, 1
      %s35 = ssub.s32 %s29, 2
      %s42 = sadd.s32 1, %s37
      %p43 = scmp.ge.s32.totalorder %s42, 1
      %s44 = scalar_select %p43, 0, %s42
      %s45 = sadd.s32 1, %s36
      %s46 = scalar_select %p43, %s45, %s36
      %p47 = scmp.ge.s32.totalorder %s46, 2
      %s48 = scalar_select %p47, 0, %s46
      %s49 = ssub.s32 %s36, %s48
      %p50 = scmp.eq.s32.totalorder %s49, 0
      %s52 = sadd.s32 %s51, 1
      %s53 = scalar_select %p50, %s51, %s52
      %p56 = pneg %p50
      %p57 = scmp.eq.s32.totalorder %s29, 1
      %p58 = por %p56, %p57
      %p59 = scmp.ne.s32.totalorder %s51, %s54
      %p60 = scmp.eq.s32.totalorder %s29, 0
      %p61 = por %p59, %p60
      %p62 = scmp.ne.s32.totalorder %s51, %s54
      %p63 = scmp.eq.s32.totalorder %s34, 1
      %p64 = por %p62, %p63
      %p65 = scmp.ne.s32.totalorder %s54, %s55
      %p66 = scmp.eq.s32.totalorder %s34, 0
      %p67 = por %p65, %p66
      %p68 = scmp.ne.s32.totalorder %s54, %s55
      %p69 = scmp.eq.s32.totalorder %s35, 1
      %p70 = por %p68, %p69
      %p72 = scmp.ne.s32.totalorder %s55, %s71
      %p73 = scmp.eq.s32.totalorder %s35, 0
      %p74 = por %p72, %p73
      %s76 = sadd.s32 %s75, 1
      %p79 = scmp.eq.s32.totalorder %s29, 1
      %p80 = scmp.ne.s32.totalorder %s75, %s77
      %p81 = scmp.eq.s32.totalorder %s29, 0
      %p82 = por %p80, %p81
      %p83 = scmp.ne.s32.totalorder %s75, %s77
      %p84 = scmp.eq.s32.totalorder %s34, 1
      %p85 = por %p83, %p84
      %p86 = scmp.ne.s32.totalorder %s77, %s78
      %p87 = scmp.eq.s32.totalorder %s34, 0
      %p88 = por %p86, %p87
      %p89 = scmp.ne.s32.totalorder %s77, %s78
      %p90 = scmp.eq.s32.totalorder %s35, 1
      %p91 = por %p89, %p90
      %p93 = scmp.ne.s32.totalorder %s78, %s92
      %p94 = scmp.eq.s32.totalorder %s35, 0
      %p95 = por %p93, %p94
      %s97 = sadd.s32 %s96, 1
      %p100 = scmp.eq.s32.totalorder %s29, 1
      %p101 = scmp.ne.s32.totalorder %s96, %s98
      %p102 = scmp.eq.s32.totalorder %s29, 0
      %p103 = por %p101, %p102
      %p104 = scmp.ne.s32.totalorder %s96, %s98
      %p105 = scmp.eq.s32.totalorder %s34, 1
      %p106 = por %p104, %p105
      %p107 = scmp.ne.s32.totalorder %s98, %s99
      %p108 = scmp.eq.s32.totalorder %s34, 0
      %p109 = por %p107, %p108
      %p110 = scmp.ne.s32.totalorder %s98, %s99
      %p111 = scmp.eq.s32.totalorder %s35, 1
      %p112 = por %p110, %p111
      %p114 = scmp.ne.s32.totalorder %s99, %s113
      %p115 = scmp.eq.s32.totalorder %s35, 0
      %p116 = por %p114, %p115
      %s118 = sadd.s32 %s117, 1
      %p121 = scmp.eq.s32.totalorder %s29, 1
      %p122 = scmp.ne.s32.totalorder %s117, %s119
      %p123 = scmp.eq.s32.totalorder %s29, 0
      %p124 = por %p122, %p123
      %p125 = scmp.ne.s32.totalorder %s117, %s119
      %p126 = scmp.eq.s32.totalorder %s34, 1
      %p127 = por %p125, %p126
      %p128 = scmp.ne.s32.totalorder %s119, %s120
      %p129 = scmp.eq.s32.totalorder %s34, 0
      %p130 = por %p128, %p129
      %p131 = scmp.ne.s32.totalorder %s119, %s120
      %p132 = scmp.eq.s32.totalorder %s35, 1
      %p133 = por %p131, %p132
      %p135 = scmp.ne.s32.totalorder %s120, %s134
      %p136 = scmp.eq.s32.totalorder %s35, 0
      %p137 = por %p135, %p136
      %s139 = sadd.s32 %s138, 1
      %p142 = scmp.eq.s32.totalorder %s29, 1
      %p143 = scmp.ne.s32.totalorder %s138, %s140
      %p144 = scmp.eq.s32.totalorder %s29, 0
      %p145 = por %p143, %p144
      %p146 = scmp.ne.s32.totalorder %s138, %s140
      %p147 = scmp.eq.s32.totalorder %s34, 1
      %p148 = por %p146, %p147
      %p149 = scmp.ne.s32.totalorder %s140, %s141
      %p150 = scmp.eq.s32.totalorder %s34, 0
      %p151 = por %p149, %p150
      %p152 = scmp.ne.s32.totalorder %s140, %s141
      %p153 = scmp.eq.s32.totalorder %s35, 1
      %p154 = por %p152, %p153
      %p156 = scmp.ne.s32.totalorder %s141, %s155
      %p157 = scmp.eq.s32.totalorder %s35, 0
      %p158 = por %p156, %p157
      %s160 = sadd.s32 %s159, 1
      %p163 = scmp.eq.s32.totalorder %s29, 1
      %p164 = scmp.ne.s32.totalorder %s159, %s161
      %p165 = scmp.eq.s32.totalorder %s29, 0
      %p166 = por %p164, %p165
      %p167 = scmp.ne.s32.totalorder %s159, %s161
      %p168 = scmp.eq.s32.totalorder %s34, 1
      %p169 = por %p167, %p168
      %p170 = scmp.ne.s32.totalorder %s161, %s162
      %p171 = scmp.eq.s32.totalorder %s34, 0
      %p172 = por %p170, %p171
      %p173 = scmp.ne.s32.totalorder %s161, %s162
      %p174 = scmp.eq.s32.totalorder %s35, 1
      %p175 = por %p173, %p174
      %p177 = scmp.ne.s32.totalorder %s162, %s176
      %p178 = scmp.eq.s32.totalorder %s35, 0
      %p179 = por %p177, %p178
      %s181 = sadd.s32 %s180, 1
      %p184 = scmp.eq.s32.totalorder %s29, 1
      %p185 = scmp.ne.s32.totalorder %s180, %s182
      %p186 = scmp.eq.s32.totalorder %s29, 0
      %p187 = por %p185, %p186
      %p188 = scmp.ne.s32.totalorder %s180, %s182
      %p189 = scmp.eq.s32.totalorder %s34, 1
      %p190 = por %p188, %p189
      %p191 = scmp.ne.s32.totalorder %s182, %s183
      %p192 = scmp.eq.s32.totalorder %s34, 0
      %p193 = por %p191, %p192
      %p194 = scmp.ne.s32.totalorder %s182, %s183
      %p195 = scmp.eq.s32.totalorder %s35, 1
      %p196 = por %p194, %p195
      %p198 = scmp.ne.s32.totalorder %s183, %s197
      %p199 = scmp.eq.s32.totalorder %s35, 0
      %p200 = por %p198, %p199
      %s202 = sadd.s32 %s201, 1
      %p205 = scmp.eq.s32.totalorder %s29, 1
      %p206 = scmp.ne.s32.totalorder %s201, %s203
      %p207 = scmp.eq.s32.totalorder %s29, 0
      %p208 = por %p206, %p207
      %p209 = scmp.ne.s32.totalorder %s201, %s203
      %p210 = scmp.eq.s32.totalorder %s34, 1
      %p211 = por %p209, %p210
      %p212 = scmp.ne.s32.totalorder %s203, %s204
      %p213 = scmp.eq.s32.totalorder %s34, 0
      %p214 = por %p212, %p213
      %p215 = scmp.ne.s32.totalorder %s203, %s204
      %p216 = scmp.eq.s32.totalorder %s35, 1
      %p217 = por %p215, %p216
      %p219 = scmp.ne.s32.totalorder %s204, %s218
      %p220 = scmp.eq.s32.totalorder %s35, 0
      %p221 = por %p219, %p220
      %s223 = sadd.s32 %s222, 1
      %p226 = scmp.eq.s32.totalorder %s29, 1
      %p227 = scmp.ne.s32.totalorder %s222, %s224
      %p228 = scmp.eq.s32.totalorder %s29, 0
      %p229 = por %p227, %p228
      %p230 = scmp.ne.s32.totalorder %s222, %s224
      %p231 = scmp.eq.s32.totalorder %s34, 1
      %p232 = por %p230, %p231
      %p233 = scmp.ne.s32.totalorder %s224, %s225
      %p234 = scmp.eq.s32.totalorder %s34, 0
      %p235 = por %p233, %p234
      %p236 = scmp.ne.s32.totalorder %s224, %s225
      %p237 = scmp.eq.s32.totalorder %s35, 1
      %p238 = por %p236, %p237
      %p240 = scmp.ne.s32.totalorder %s225, %s239
      %p241 = scmp.eq.s32.totalorder %s35, 0
      %p242 = por %p240, %p241
      %s244 = sadd.s32 %s243, 1
      %p247 = scmp.eq.s32.totalorder %s29, 1
      %p248 = scmp.ne.s32.totalorder %s243, %s245
      %p249 = scmp.eq.s32.totalorder %s29, 0
      %p250 = por %p248, %p249
      %p251 = scmp.ne.s32.totalorder %s243, %s245
      %p252 = scmp.eq.s32.totalorder %s34, 1
      %p253 = por %p251, %p252
      %p254 = scmp.ne.s32.totalorder %s245, %s246
      %p255 = scmp.eq.s32.totalorder %s34, 0
      %p256 = por %p254, %p255
      %p257 = scmp.ne.s32.totalorder %s245, %s246
      %p258 = scmp.eq.s32.totalorder %s35, 1
      %p259 = por %p257, %p258
      %p261 = scmp.ne.s32.totalorder %s246, %s260
      %p262 = scmp.eq.s32.totalorder %s35, 0
      %p263 = por %p261, %p262
      %s265 = sadd.s32 %s264, 1
      %p268 = scmp.eq.s32.totalorder %s29, 1
      %p269 = scmp.ne.s32.totalorder %s264, %s266
      %p270 = scmp.eq.s32.totalorder %s29, 0
      %p271 = por %p269, %p270
      %p272 = scmp.ne.s32.totalorder %s264, %s266
      %p273 = scmp.eq.s32.totalorder %s34, 1
      %p274 = por %p272, %p273
      %p275 = scmp.ne.s32.totalorder %s266, %s267
      %p276 = scmp.eq.s32.totalorder %s34, 0
      %p277 = por %p275, %p276
      %p278 = scmp.ne.s32.totalorder %s266, %s267
      %p279 = scmp.eq.s32.totalorder %s35, 1
      %p280 = por %p278, %p279
      %p282 = scmp.ne.s32.totalorder %s267, %s281
      %p283 = scmp.eq.s32.totalorder %s35, 0
      %p284 = por %p282, %p283
      %s286 = sadd.s32 %s285, 1
      %p289 = scmp.eq.s32.totalorder %s29, 1
      %p290 = scmp.ne.s32.totalorder %s285, %s287
      %p291 = scmp.eq.s32.totalorder %s29, 0
      %p292 = por %p290, %p291
      %p293 = scmp.ne.s32.totalorder %s285, %s287
      %p294 = scmp.eq.s32.totalorder %s34, 1
      %p295 = por %p293, %p294
      %p296 = scmp.ne.s32.totalorder %s287, %s288
      %p297 = scmp.eq.s32.totalorder %s34, 0
      %p298 = por %p296, %p297
      %p299 = scmp.ne.s32.totalorder %s287, %s288
      %p300 = scmp.eq.s32.totalorder %s35, 1
      %p301 = por %p299, %p300
      %p303 = scmp.ne.s32.totalorder %s288, %s302
      %p304 = scmp.eq.s32.totalorder %s35, 0
      %p305 = por %p303, %p304
      %s307 = sadd.s32 %s306, 1
      %p310 = scmp.eq.s32.totalorder %s29, 1
      %p311 = scmp.ne.s32.totalorder %s306, %s308
      %p312 = scmp.eq.s32.totalorder %s29, 0
      %p313 = por %p311, %p312
      %p314 = scmp.ne.s32.totalorder %s306, %s308
      %p315 = scmp.eq.s32.totalorder %s34, 1
      %p316 = por %p314, %p315
      %p317 = scmp.ne.s32.totalorder %s308, %s309
      %p318 = scmp.eq.s32.totalorder %s34, 0
      %p319 = por %p317, %p318
      %p320 = scmp.ne.s32.totalorder %s308, %s309
      %p321 = scmp.eq.s32.totalorder %s35, 1
      %p322 = por %p320, %p321
      %p324 = scmp.ne.s32.totalorder %s309, %s323
      %p325 = scmp.eq.s32.totalorder %s35, 0
      %p326 = por %p324, %p325
      %s328 = sadd.s32 %s327, 1
      %p331 = scmp.eq.s32.totalorder %s29, 1
      %p332 = scmp.ne.s32.totalorder %s327, %s329
      %p333 = scmp.eq.s32.totalorder %s29, 0
      %p334 = por %p332, %p333
      %p335 = scmp.ne.s32.totalorder %s327, %s329
      %p336 = scmp.eq.s32.totalorder %s34, 1
      %p337 = por %p335, %p336
      %p338 = scmp.ne.s32.totalorder %s329, %s330
      %p339 = scmp.eq.s32.totalorder %s34, 0
      %p340 = por %p338, %p339
      %p341 = scmp.ne.s32.totalorder %s329, %s330
      %p342 = scmp.eq.s32.totalorder %s35, 1
      %p343 = por %p341, %p342
      %p345 = scmp.ne.s32.totalorder %s330, %s344
      %p346 = scmp.eq.s32.totalorder %s35, 0
      %p347 = por %p345, %p346
      %s349 = sadd.s32 %s348, 1
      %p352 = scmp.eq.s32.totalorder %s29, 1
      %p353 = scmp.ne.s32.totalorder %s348, %s350
      %p354 = scmp.eq.s32.totalorder %s29, 0
      %p355 = por %p353, %p354
      %p356 = scmp.ne.s32.totalorder %s348, %s350
      %p357 = scmp.eq.s32.totalorder %s34, 1
      %p358 = por %p356, %p357
      %p359 = scmp.ne.s32.totalorder %s350, %s351
      %p360 = scmp.eq.s32.totalorder %s34, 0
      %p361 = por %p359, %p360
      %p362 = scmp.ne.s32.totalorder %s350, %s351
      %p363 = scmp.eq.s32.totalorder %s35, 1
      %p364 = por %p362, %p363
      %p366 = scmp.ne.s32.totalorder %s351, %s365
      %p367 = scmp.eq.s32.totalorder %s35, 0
      %p368 = por %p366, %p367
      %s370 = sadd.s32 %s369, 1
      %p373 = scmp.eq.s32.totalorder %s29, 1
      %p374 = scmp.ne.s32.totalorder %s369, %s371
      %p375 = scmp.eq.s32.totalorder %s29, 0
      %p376 = por %p374, %p375
      %p377 = scmp.ne.s32.totalorder %s369, %s371
      %p378 = scmp.eq.s32.totalorder %s34, 1
      %p379 = por %p377, %p378
      %p380 = scmp.ne.s32.totalorder %s371, %s372
      %p381 = scmp.eq.s32.totalorder %s34, 0
      %p382 = por %p380, %p381
      %p383 = scmp.ne.s32.totalorder %s371, %s372
      %p384 = scmp.eq.s32.totalorder %s35, 1
      %p385 = por %p383, %p384
      %p387 = scmp.ne.s32.totalorder %s372, %s386
      %p388 = scmp.eq.s32.totalorder %s35, 0
      %p389 = por %p387, %p388
      %s391 = sadd.s32 %s390, 1
      %p394 = scmp.eq.s32.totalorder %s29, 1
      %p395 = scmp.ne.s32.totalorder %s390, %s392
      %p396 = scmp.eq.s32.totalorder %s29, 0
      %p397 = por %p395, %p396
      %p398 = scmp.ne.s32.totalorder %s390, %s392
      %p399 = scmp.eq.s32.totalorder %s34, 1
      %p400 = por %p398, %p399
      %p401 = scmp.ne.s32.totalorder %s392, %s393
      %p402 = scmp.eq.s32.totalorder %s34, 0
      %p403 = por %p401, %p402
      %p404 = scmp.ne.s32.totalorder %s392, %s393
      %p405 = scmp.eq.s32.totalorder %s35, 1
      %p406 = por %p404, %p405
      %p408 = scmp.ne.s32.totalorder %s393, %s407
      %p409 = scmp.eq.s32.totalorder %s35, 0
      %p410 = por %p408, %p409
      %s411 = ssub.s32 %s36, %s48
      %s412 = ssub.s32 %s37, %s44
      %s413 = sor.u32 %s411, %s412
      %p414 = scmp.eq.s32.totalorder %s413, 0
      %s416 = sadd.s32 %s415, 1
      %s417 = scalar_select %p414, %s415, %s416
      %p420 = pneg %p414
      %p421 = scmp.eq.s32.totalorder %s29, 1
      %p422 = por %p420, %p421
      %p423 = scmp.ne.s32.totalorder %s415, %s418
      %p424 = scmp.eq.s32.totalorder %s29, 0
      %p425 = por %p423, %p424
      %p426 = scmp.ne.s32.totalorder %s415, %s418
      %p427 = scmp.eq.s32.totalorder %s34, 1
      %p428 = por %p426, %p427
      %p429 = scmp.ne.s32.totalorder %s418, %s419
      %p430 = scmp.eq.s32.totalorder %s34, 0
      %p431 = por %p429, %p430
      %p432 = scmp.ne.s32.totalorder %s418, %s419
      %p433 = scmp.eq.s32.totalorder %s35, 1
      %p434 = por %p432, %p433
      %p436 = scmp.ne.s32.totalorder %s419, %s435
      %p437 = scmp.eq.s32.totalorder %s35, 0
      %p438 = por %p436, %p437
      %p439 = scmp.le.s32.totalorder 1, %s29
      %p440 = scmp.lt.s32.totalorder %s29, 3
      %p441 = pnand %p439, %p440
      %p442 = pneg %p441
      // Predicated region
      $region9: #{tpu_custom_call.1} parent=5 // pred_check
        _
      $region10: #{tpu_custom_call.1} parent=5 // pred_check_branch
        %444 = sbr.rel (%p441) target = $region12
      $region11: #{tpu_custom_call.1} parent=5 // pred_region
        %s445 = ssub.s32 %s29, 1
        // Predicated region
        $region13: #{tpu_custom_call.1} parent=11 // pred_check
          %p446 = pneg %p88
        $region14: #{tpu_custom_call.1} parent=11 // pred_check_branch
          %448 = sbr.rel (%p446) target = $region16
        $region15: #{tpu_custom_call.1} parent=11 // pred_region
          _
        $region16: #{tpu_custom_call.1} parent=11 // pred_fallthru
          _
        // Predicated region
        $region17: #{tpu_custom_call.1} parent=11 // pred_check
          %p449 = pneg %p109
        $region18: #{tpu_custom_call.1} parent=11 // pred_check_branch
          %451 = sbr.rel (%p449) target = $region20
        $region19: #{tpu_custom_call.1} parent=11 // pred_region
          _
        $region20: #{tpu_custom_call.1} parent=11 // pred_fallthru
          _
        // Predicated region
        $region21: #{tpu_custom_call.1} parent=11 // pred_check
          %p452 = pneg %p130
        $region22: #{tpu_custom_call.1} parent=11 // pred_check_branch
          %454 = sbr.rel (%p452) target = $region24
        $region23: #{tpu_custom_call.1} parent=11 // pred_region
          %s456 = ssub.s32 256, 256
          %457 = vsyncadd [#allocation7], %s456
          %s458 = sshll.u32 [#allocation6], 4
          %s459 = int_to_ptr.vmem [resolvable:$true] %s458
          %464 = dma.hbm_to_vmem [thread:$0]  %s3, 256, %s459, [#allocation7], 64, 64, 4
        $region24: #{tpu_custom_call.1} parent=11 // pred_fallthru
          _
        // Predicated region
        $region25: #{tpu_custom_call.1} parent=11 // pred_check
          %p465 = pneg %p151
        $region26: #{tpu_custom_call.1} parent=11 // pred_check_branch
          %467 = sbr.rel (%p465) target = $region28
        $region27: #{tpu_custom_call.1} parent=11 // pred_region
          _
        $region28: #{tpu_custom_call.1} parent=11 // pred_fallthru
          _
        // Predicated region
        $region29: #{tpu_custom_call.1} parent=11 // pred_check
          %p468 = pneg %p172
        $region30: #{tpu_custom_call.1} parent=11 // pred_check_branch
          %470 = sbr.rel (%p468) target = $region32
        $region31: #{tpu_custom_call.1} parent=11 // pred_region
          _
        $region32: #{tpu_custom_call.1} parent=11 // pred_fallthru
          _
        // Predicated region
        $region33: #{tpu_custom_call.1} parent=11 // pred_check
          %p471 = pneg %p193
        $region34: #{tpu_custom_call.1} parent=11 // pred_check_branch
          %473 = sbr.rel (%p471) target = $region36
        $region35: #{tpu_custom_call.1} parent=11 // pred_region
          %s475 = ssub.s32 16, 16
          %476 = vsyncadd [#allocation10], %s475
          %s478 = sshll.u32 [#allocation9], 4
          %s479 = int_to_ptr.vmem [resolvable:$true] %s478
          %481 = dma.hbm_to_vmem [thread:$0]  %s6, 16, %s479, [#allocation10]
        $region36: #{tpu_custom_call.1} parent=11 // pred_fallthru
          _
        // Predicated region
        $region37: #{tpu_custom_call.1} parent=11 // pred_check
          %p482 = pneg %p214
        $region38: #{tpu_custom_call.1} parent=11 // pred_check_branch
          %484 = sbr.rel (%p482) target = $region40
        $region39: #{tpu_custom_call.1} parent=11 // pred_region
          %s486 = ssub.s32 256, 256
          %487 = vsyncadd [#allocation10], %s486
          %s488 = sshll.u32 [#allocation11], 4
          %s489 = int_to_ptr.vmem [resolvable:$true] %s488
          %494 = dma.hbm_to_vmem [thread:$0]  %s7, 256, %s489, [#allocation10], 64, 64, 4
        $region40: #{tpu_custom_call.1} parent=11 // pred_fallthru
          _
        // Predicated region
        $region41: #{tpu_custom_call.1} parent=11 // pred_check
          %p495 = pneg %p235
        $region42: #{tpu_custom_call.1} parent=11 // pred_check_branch
          %497 = sbr.rel (%p495) target = $region44
        $region43: #{tpu_custom_call.1} parent=11 // pred_region
          %s499 = ssub.s32 16, 16
          %500 = vsyncadd [#allocation13], %s499
          %s502 = sshll.u32 [#allocation12], 4
          %s503 = int_to_ptr.vmem [resolvable:$true] %s502
          %505 = dma.hbm_to_vmem [thread:$0]  %s8, 16, %s503, [#allocation13]
        $region44: #{tpu_custom_call.1} parent=11 // pred_fallthru
          _
        // Predicated region
        $region45: #{tpu_custom_call.1} parent=11 // pred_check
          %p506 = pneg %p256
        $region46: #{tpu_custom_call.1} parent=11 // pred_check_branch
          %508 = sbr.rel (%p506) target = $region48
        $region47: #{tpu_custom_call.1} parent=11 // pred_region
          _
        $region48: #{tpu_custom_call.1} parent=11 // pred_fallthru
          _
        // Predicated region
        $region49: #{tpu_custom_call.1} parent=11 // pred_check
          %p509 = pneg %p277
        $region50: #{tpu_custom_call.1} parent=11 // pred_check_branch
          %511 = sbr.rel (%p509) target = $region52
        $region51: #{tpu_custom_call.1} parent=11 // pred_region
          _
        $region52: #{tpu_custom_call.1} parent=11 // pred_fallthru
          _
        // Predicated region
        $region53: #{tpu_custom_call.1} parent=11 // pred_check
          %p512 = pneg %p298
        $region54: #{tpu_custom_call.1} parent=11 // pred_check_branch
          %514 = sbr.rel (%p512) target = $region56
        $region55: #{tpu_custom_call.1} parent=11 // pred_region
          _
        $region56: #{tpu_custom_call.1} parent=11 // pred_fallthru
          _
        // Predicated region
        $region57: #{tpu_custom_call.1} parent=11 // pred_check
          %p515 = pneg %p319
        $region58: #{tpu_custom_call.1} parent=11 // pred_check_branch
          %517 = sbr.rel (%p515) target = $region60
        $region59: #{tpu_custom_call.1} parent=11 // pred_region
          _
        $region60: #{tpu_custom_call.1} parent=11 // pred_fallthru
          _
        // Predicated region
        $region61: #{tpu_custom_call.1} parent=11 // pred_check
          %p518 = pneg %p340
        $region62: #{tpu_custom_call.1} parent=11 // pred_check_branch
          %520 = sbr.rel (%p518) target = $region64
        $region63: #{tpu_custom_call.1} parent=11 // pred_region
          _
        $region64: #{tpu_custom_call.1} parent=11 // pred_fallthru
          _
        // Predicated region
        $region65: #{tpu_custom_call.1} parent=11 // pred_check
          %p521 = pneg %p361
        $region66: #{tpu_custom_call.1} parent=11 // pred_check_branch
          %523 = sbr.rel (%p521) target = $region68
        $region67: #{tpu_custom_call.1} parent=11 // pred_region
          _
        $region68: #{tpu_custom_call.1} parent=11 // pred_fallthru
          _
        // Predicated region
        $region69: #{tpu_custom_call.1} parent=11 // pred_check
          %p524 = pneg %p382
        $region70: #{tpu_custom_call.1} parent=11 // pred_check_branch
          %526 = sbr.rel (%p524) target = $region72
        $region71: #{tpu_custom_call.1} parent=11 // pred_region
          _
        $region72: #{tpu_custom_call.1} parent=11 // pred_fallthru
          _
        // Predicated region
        $region73: #{tpu_custom_call.1} parent=11 // pred_check
          %p527 = pneg %p403
        $region74: #{tpu_custom_call.1} parent=11 // pred_check_branch
          %529 = sbr.rel (%p527) target = $region76
        $region75: #{tpu_custom_call.1} parent=11 // pred_region
          _
        $region76: #{tpu_custom_call.1} parent=11 // pred_fallthru
          _
      $region12: #{tpu_custom_call.1} parent=5 // pred_fallthru
        _
      %p530 = scmp.lt.s32.totalorder %s29, 2
      // Predicated region
      $region77: #{tpu_custom_call.1} parent=5 // pred_check
        %p531 = pneg %p530
      $region78: #{tpu_custom_call.1} parent=5 // pred_check_branch
        %533 = sbr.rel (%p531) target = $region80
      $region79: #{tpu_custom_call.1} parent=5 // pred_region
        // Predicated region
        $region81: #{tpu_custom_call.1} parent=79 // pred_check
          %p534 = pneg %p61
        $region82: #{tpu_custom_call.1} parent=79 // pred_check_branch
          %536 = sbr.rel (%p534) target = $region84
        $region83: #{tpu_custom_call.1} parent=79 // pred_region
          %p537 = scmp.lt.s32.totalorder %s36, 1
          %s538 = scalar_select %p537, %s36, 1
          %s539 = smul.addr %s538, 8
          %s540 = scalar_lea.vmem %s0, %s539
        $region84: #{tpu_custom_call.1} parent=79 // pred_fallthru
          _
      $region80: #{tpu_custom_call.1} parent=5 // pred_fallthru
        _
      %p541 = scmp.le.s32.totalorder 1, %s29
      %p542 = scmp.lt.s32.totalorder %s29, 3
      %p543 = pnand %p541, %p542
      %p544 = pneg %p543
      // Predicated region
      $region85: #{tpu_custom_call.1} parent=5 // pred_check
        _
      $region86: #{tpu_custom_call.1} parent=5 // pred_check_branch
        %546 = sbr.rel (%p543) target = $region88
      $region87: #{tpu_custom_call.1} parent=5 // pred_region
        %s547 = ssub.s32 %s29, 1
        // Predicated region
        $region89: #{tpu_custom_call.1} parent=87 // pred_check
          %p548 = pneg %p130
        $region90: #{tpu_custom_call.1} parent=87 // pred_check_branch
          %550 = sbr.rel (%p548) target = $region92
        $region91: #{tpu_custom_call.1} parent=87 // pred_region
          %551 = dma.done [#allocation7], 256
        $region92: #{tpu_custom_call.1} parent=87 // pred_fallthru
          _
        // Predicated region
        $region93: #{tpu_custom_call.1} parent=87 // pred_check
          %p552 = pneg %p193
        $region94: #{tpu_custom_call.1} parent=87 // pred_check_branch
          %554 = sbr.rel (%p552) target = $region96
        $region95: #{tpu_custom_call.1} parent=87 // pred_region
          %555 = dma.done [#allocation10], 16
        $region96: #{tpu_custom_call.1} parent=87 // pred_fallthru
          _
        // Predicated region
        $region97: #{tpu_custom_call.1} parent=87 // pred_check
          %p556 = pneg %p214
        $region98: #{tpu_custom_call.1} parent=87 // pred_check_branch
          %558 = sbr.rel (%p556) target = $region100
        $region99: #{tpu_custom_call.1} parent=87 // pred_region
          %559 = dma.done [#allocation10], 256
        $region100: #{tpu_custom_call.1} parent=87 // pred_fallthru
          _
        // Predicated region
        $region101: #{tpu_custom_call.1} parent=87 // pred_check
          %p560 = pneg %p235
        $region102: #{tpu_custom_call.1} parent=87 // pred_check_branch
          %562 = sbr.rel (%p560) target = $region104
        $region103: #{tpu_custom_call.1} parent=87 // pred_region
          %563 = dma.done [#allocation13], 16
        $region104: #{tpu_custom_call.1} parent=87 // pred_fallthru
          _
        %p564 = scmp.lt.s32.totalorder %s38, 1
        %s565 = scalar_select %p564, %s38, 1
        %s566 = smul.addr %s565, 8
        %s567 = scalar_lea.vmem %s0, %s566
        %p568 = pneg %p67
        %p569 = pneg %p64
        %p570 = pneg %p88
        %p571 = pneg %p85
        %p572 = pneg %p109
        %p573 = pneg %p106
        %p574 = pneg %p130
        %p575 = pneg %p127
        %p576 = pneg %p151
        %p577 = pneg %p148
        %p578 = pneg %p172
        %p579 = pneg %p169
        %p580 = pneg %p193
        %p581 = pneg %p190
        %p582 = pneg %p214
        %p583 = pneg %p211
        %p584 = pneg %p235
        %p585 = pneg %p232
        %p586 = pneg %p256
        %p587 = pneg %p253
        %p588 = pneg %p277
        %p589 = pneg %p274
        %p590 = pneg %p298
        %p591 = pneg %p295
        %p592 = pneg %p319
        %p593 = pneg %p316
        %p594 = pneg %p340
        %p595 = pneg %p337
        %p596 = pneg %p361
        %p597 = pneg %p358
        %p598 = pneg %p382
        %p599 = pneg %p379
        %p600 = pneg %p403
        %p601 = pneg %p400
        %p602 = pneg %p431
        %p603 = pneg %p428
        %s604 = sand.u32 %s418, 1
        %s605 = scalar_lea.sflag [#allocation8], %s604
        %s606 = sand.u32 %s418, 1
        %s607 = smul.addr %s606, 8
        %s608 = scalar_lea.vmem [#allocation14], %s607
        %p609 = scmp.lt.s32.totalorder %s38, 1
        %s610 = scalar_select %p609, %s38, 1
        %s611 = smul.addr %s610, 8
        %s612 = scalar_lea.vmem %s0, %s611
        %p614 = scmp.eq.s32.totalorder %s39, 0
        // Predicated region
        $region105: #{tpu_custom_call.1} parent=87 // pred_check
          %p615 = pneg %p614
        $region106: #{tpu_custom_call.1} parent=87 // pred_check_branch
          %617 = sbr.rel (%p615) target = $region108
        $region107: #{tpu_custom_call.1} parent=87 // pred_region
          %v618 = vld [vmem:[%s612] sm:$0xff]
          %v619 = vpack.c.bf16 %v618, %v618
          %v620 = vld [vmem:[%s2] sm:$0xf]
          %v621 = vld [vmem:[%s2 + $0x4] sm:$0xf]
          %v622 = vld [vmem:[%s2 + $0x8] sm:$0xf]
          %v623 = vld [vmem:[%s2 + $0xc] sm:$0xf]
          %v624 = vld [vmem:[%s5] sm:$0x1]
          %v626 = vlaneseq
          %v627 = vshrl.u32 %v626, 7
          %v628 = vsub.s32 0, %v627
          %v629 = vrot.slane %v624, %v628
          %v635 = vunpack.c.l.b16 %v620
          %v636 = vunpack.c.l.b16 %v621
          %v637 = vunpack.c.l.b16 %v622
          %v638 = vunpack.c.l.b16 %v623
          %v639 = vpack.c.b16 %v636, %v635
          %v640 = vpack.c.b16 %v638, %v637
          %vm643 = vcmask 261120
          %v645 = vsel %vm643, %v619, 0
          %647 = vmatprep.subr.bf16.mxu0 0
          %648 = vmatpush1.bf16.msra.mxu0 %v639
          %649 = vmatprep.subr.bf16.mxu0 0
          %650 = vmatpush1.bf16.msra.mxu0 %v640
          %651 = vmatprep.subr.bf16.mxu0 0
          %652 = vmatpush1.bf16.msra.mxu0 0
          %653 = vmatprep.subr.bf16.mxu0 0
          %654 = vmatpush1.bf16.msra.mxu0 0
          %655 = vmatprep.subr.bf16.mxu0 0
          %656 = vmatpush1.bf16.msra.mxu0 0
          %657 = vmatprep.subr.bf16.mxu0 0
          %658 = vmatpush1.bf16.msra.mxu0 0
          %659 = vmatprep.subr.bf16.mxu0 0
          %660 = vmatpush1.bf16.msra.mxu0 0
          %661 = vmatprep.subr.bf16.mxu0 0
          %662 = vmatpush1.bf16.msra.mxu0 0
          %663 = vmatprep.subr.bf16.mxu0 0
          %664 = vmatpush1.bf16.msra.mxu0 0
          %665 = vmatprep.subr.bf16.mxu0 0
          %666 = vmatpush1.bf16.msra.mxu0 0
          %667 = vmatprep.subr.bf16.mxu0 0
          %668 = vmatpush1.bf16.msra.mxu0 0
          %669 = vmatprep.subr.bf16.mxu0 0
          %670 = vmatpush1.bf16.msra.mxu0 0
          %671 = vmatprep.subr.bf16.mxu0 0
          %672 = vmatpush1.bf16.msra.mxu0 0
          %673 = vmatprep.subr.bf16.mxu0 0
          %674 = vmatpush1.bf16.msra.mxu0 0
          %675 = vmatprep.subr.bf16.mxu0 0
          %676 = vmatpush1.bf16.msra.mxu0 0
          %677 = vmatprep.subr.bf16.mxu0 0
          %678 = vmatpush1.bf16.msra.mxu0 0
          %679 = vmatprep.mubr.bf16.mxu0 0
          %680 = vmatmul.mubr.bf16.gmra.mrb[0].mxu0 %v645
          %v681 = vpop.f32.mrb[0].mxu0
          %v682 = vadd.f32 %v629, %v681
          %v683 = vpop.f32.mrb[0].mxu0
          %v684 = vpop.f32.mrb[0].mxu0
          %v685 = vpop.f32.mrb[0].mxu0
          %686 = vdwg.mxu0
          %v687 = vld [vmem:[#allocation6] sm:$0xf]
          %v688 = vld [vmem:[#allocation6 + $0x4] sm:$0xf]
          %v689 = vld [vmem:[#allocation6 + $0x8] sm:$0xf]
          %v690 = vld [vmem:[#allocation6 + $0xc] sm:$0xf]
          %v691 = vld [vmem:[#allocation9] sm:$0x1]
          %v693 = vlaneseq
          %v694 = vshrl.u32 %v693, 7
          %v695 = vsub.s32 0, %v694
          %v696 = vrot.slane %v691, %v695
          %v702 = vunpack.c.l.b16 %v687
          %v703 = vunpack.c.l.b16 %v688
          %v704 = vunpack.c.l.b16 %v689
          %v705 = vunpack.c.l.b16 %v690
          %v706 = vpack.c.b16 %v703, %v702
          %v707 = vpack.c.b16 %v705, %v704
          %710 = vmatprep.subr.bf16.mxu0 0
          %711 = vmatpush1.bf16.msra.mxu0 %v706
          %712 = vmatprep.subr.bf16.mxu0 0
          %713 = vmatpush1.bf16.msra.mxu0 %v707
          %714 = vmatprep.subr.bf16.mxu0 0
          %715 = vmatpush1.bf16.msra.mxu0 0
          %716 = vmatprep.subr.bf16.mxu0 0
          %717 = vmatpush1.bf16.msra.mxu0 0
          %718 = vmatprep.subr.bf16.mxu0 0
          %719 = vmatpush1.bf16.msra.mxu0 0
          %720 = vmatprep.subr.bf16.mxu0 0
          %721 = vmatpush1.bf16.msra.mxu0 0
          %722 = vmatprep.subr.bf16.mxu0 0
          %723 = vmatpush1.bf16.msra.mxu0 0
          %724 = vmatprep.subr.bf16.mxu0 0
          %725 = vmatpush1.bf16.msra.mxu0 0
          %726 = vmatprep.subr.bf16.mxu0 0
          %727 = vmatpush1.bf16.msra.mxu0 0
          %728 = vmatprep.subr.bf16.mxu0 0
          %729 = vmatpush1.bf16.msra.mxu0 0
          %730 = vmatprep.subr.bf16.mxu0 0
          %731 = vmatpush1.bf16.msra.mxu0 0
          %732 = vmatprep.subr.bf16.mxu0 0
          %733 = vmatpush1.bf16.msra.mxu0 0
          %734 = vmatprep.subr.bf16.mxu0 0
          %735 = vmatpush1.bf16.msra.mxu0 0
          %736 = vmatprep.subr.bf16.mxu0 0
          %737 = vmatpush1.bf16.msra.mxu0 0
          %738 = vmatprep.subr.bf16.mxu0 0
          %739 = vmatpush1.bf16.msra.mxu0 0
          %740 = vmatprep.subr.bf16.mxu0 0
          %741 = vmatpush1.bf16.msra.mxu0 0
          %742 = vmatprep.mubr.bf16.mxu0 0
          %743 = vmatmul.mubr.bf16.gmra.mrb[0].mxu0 %v645
          %v744 = vpop.f32.mrb[0].mxu0
          %v745 = vadd.f32 %v696, %v744
          %v746 = vpop.f32.mrb[0].mxu0
          %v747 = vpop.f32.mrb[0].mxu0
          %v748 = vpop.f32.mrb[0].mxu0
          %749 = vdwg.mxu0
          %v750 = vpack.c.bf16 %v682, %v682
          %vm751 = vcmask 60416
          %752 = vst.msk [vmem:[#allocation3] sm:$0xf] %vm751, %v750
          %v753 = vpack.c.bf16 %v745, %v745
          %754 = vst.msk [vmem:[#allocation4] sm:$0xf] %vm751, %v753
          %v756 = vunpack.c.l.b16 %v750
          %v757 = vpack.c.b16 %v756, %v756
          %758 = vrot.lane.b32.xlu0 %v757, 120
          %v759 = vpop.permute.xlu0 %758
          %s761 = scalar_lea.vmem [#allocation3], 4
          %762 = vst.msk [vmem:[%s761] sm:$0xf] %vm751, %v759
          %v764 = vunpack.c.l.b16 %v753
          %v765 = vpack.c.b16 %v764, %v764
          %766 = vrot.lane.b32.xlu0 %v765, 120
          %v767 = vpop.permute.xlu0 %766
          %s769 = scalar_lea.vmem [#allocation4], 4
          %770 = vst.msk [vmem:[%s769] sm:$0xf] %vm751, %v767
          %771 = vrot.lane.b32.xlu0 %v757, 112
          %v772 = vpop.permute.xlu0 %771
          %s774 = scalar_lea.vmem [#allocation3], 8
          %775 = vst.msk [vmem:[%s774] sm:$0xf] %vm751, %v772
          %776 = vrot.lane.b32.xlu0 %v765, 112
          %v777 = vpop.permute.xlu0 %776
          %s779 = scalar_lea.vmem [#allocation4], 8
          %780 = vst.msk [vmem:[%s779] sm:$0xf] %vm751, %v777
          %781 = vrot.lane.b32.xlu0 %v757, 104
          %v782 = vpop.permute.xlu0 %781
          %s784 = scalar_lea.vmem [#allocation3], 12
          %785 = vst.msk [vmem:[%s784] sm:$0xf] %vm751, %v782
          %786 = vrot.lane.b32.xlu0 %v765, 104
          %v787 = vpop.permute.xlu0 %786
          %s789 = scalar_lea.vmem [#allocation4], 12
          %790 = vst.msk [vmem:[%s789] sm:$0xf] %vm751, %v787
        $region108: #{tpu_custom_call.1} parent=87 // pred_fallthru
          _
        %s791 = smul.u32 %s39, 8
        %s792 = scalar_lea.vmem %s612, %s791
        %v793 = vld [vmem:[%s792] sm:$0xff]
        %v794 = vpack.c.bf16 %v793, %v793
        %v795 = vld [vmem:[%s1] sm:$0xf]
        %v796 = vld [vmem:[%s1 + $0x4] sm:$0xf]
        %v797 = vld [vmem:[%s1 + $0x8] sm:$0xf]
        %v798 = vld [vmem:[%s1 + $0xc] sm:$0xf]
        %v799 = vld [vmem:[%s4] sm:$0x1]
        %v801 = vlaneseq
        %v802 = vshrl.u32 %v801, 7
        %v803 = vsub.s32 0, %v802
        %v804 = vrot.slane %v799, %v803
        %v810 = vunpack.c.l.b16 %v795
        %v811 = vunpack.c.l.b16 %v796
        %v812 = vunpack.c.l.b16 %v797
        %v813 = vunpack.c.l.b16 %v798
        %v814 = vpack.c.b16 %v811, %v810
        %v815 = vpack.c.b16 %v813, %v812
        %vm818 = vcmask 261120
        %v820 = vsel %vm818, %v794, 0
        %822 = vmatprep.subr.bf16.mxu0 0
        %823 = vmatpush1.bf16.msra.mxu0 %v814
        %824 = vmatprep.subr.bf16.mxu0 0
        %825 = vmatpush1.bf16.msra.mxu0 %v815
        %826 = vmatprep.subr.bf16.mxu0 0
        %827 = vmatpush1.bf16.msra.mxu0 0
        %828 = vmatprep.subr.bf16.mxu0 0
        %829 = vmatpush1.bf16.msra.mxu0 0
        %830 = vmatprep.subr.bf16.mxu0 0
        %831 = vmatpush1.bf16.msra.mxu0 0
        %832 = vmatprep.subr.bf16.mxu0 0
        %833 = vmatpush1.bf16.msra.mxu0 0
        %834 = vmatprep.subr.bf16.mxu0 0
        %835 = vmatpush1.bf16.msra.mxu0 0
        %836 = vmatprep.subr.bf16.mxu0 0
        %837 = vmatpush1.bf16.msra.mxu0 0
        %838 = vmatprep.subr.bf16.mxu0 0
        %839 = vmatpush1.bf16.msra.mxu0 0
        %840 = vmatprep.subr.bf16.mxu0 0
        %841 = vmatpush1.bf16.msra.mxu0 0
        %842 = vmatprep.subr.bf16.mxu0 0
        %843 = vmatpush1.bf16.msra.mxu0 0
        %844 = vmatprep.subr.bf16.mxu0 0
        %845 = vmatpush1.bf16.msra.mxu0 0
        %846 = vmatprep.subr.bf16.mxu0 0
        %847 = vmatpush1.bf16.msra.mxu0 0
        %848 = vmatprep.subr.bf16.mxu0 0
        %849 = vmatpush1.bf16.msra.mxu0 0
        %850 = vmatprep.subr.bf16.mxu0 0
        %851 = vmatpush1.bf16.msra.mxu0 0
        %852 = vmatprep.subr.bf16.mxu0 0
        %853 = vmatpush1.bf16.msra.mxu0 0
        %854 = vmatprep.mubr.bf16.mxu0 0
        %855 = vmatmul.mubr.bf16.gmra.mrb[0].mxu0 %v820
        %v856 = vpop.f32.mrb[0].mxu0
        %v857 = vadd.f32 %v804, %v856
        %v858 = vpop.f32.mrb[0].mxu0
        %v859 = vpop.f32.mrb[0].mxu0
        %v860 = vpop.f32.mrb[0].mxu0
        %861 = vdwg.mxu0
        %v862 = vpack.c.bf16 %v857, %v857
        %vm863 = vcmask 60416
        %864 = vst.msk [vmem:[#allocation2] sm:$0xf] %vm863, %v862
        %v866 = vunpack.c.l.b16 %v862
        %v867 = vpack.c.b16 %v866, %v866
        %868 = vrot.lane.b32.xlu0 %v867, 120
        %v869 = vpop.permute.xlu0 %868
        %s871 = scalar_lea.vmem [#allocation2], 4
        %872 = vst.msk [vmem:[%s871] sm:$0xf] %vm863, %v869
        %873 = vrot.lane.b32.xlu0 %v867, 112
        %v874 = vpop.permute.xlu0 %873
        %s876 = scalar_lea.vmem [#allocation2], 8
        %877 = vst.msk [vmem:[%s876] sm:$0xf] %vm863, %v874
        %878 = vrot.lane.b32.xlu0 %v867, 104
        %v879 = vpop.permute.xlu0 %878
        %s881 = scalar_lea.vmem [#allocation2], 12
        %882 = vst.msk [vmem:[%s881] sm:$0xf] %vm863, %v879
        %v883 = vld [vmem:[#allocation2] sm:$0xf]
        %v884 = vld [vmem:[#allocation2 + $0x4] sm:$0xf]
        %v885 = vld [vmem:[#allocation2 + $0x8] sm:$0xf]
        %v886 = vld [vmem:[#allocation2 + $0xc] sm:$0xf]
        %v887 = vld [vmem:[#allocation3] sm:$0xf]
        %v888 = vld [vmem:[#allocation3 + $0x4] sm:$0xf]
        %v889 = vld [vmem:[#allocation3 + $0x8] sm:$0xf]
        %v890 = vld [vmem:[#allocation3 + $0xc] sm:$0xf]
        %vm891 = vcmask 64512
        %v893 = vsel %vm891, %v883, 0
        %v896 = vsel %vm891, %v887, 0
        %898 = vmatprep.subr.bf16.mxu0 0
        %899 = vmatpush1.bf16.xpose.msra.mxu0 %v896
        %900 = vmatprep.subr.bf16.mxu0 0
        %901 = vmatpush1.bf16.xpose.msra.mxu0 0
        %902 = vmatprep.subr.bf16.mxu0 0
        %903 = vmatpush1.bf16.xpose.msra.mxu0 0
        %904 = vmatprep.subr.bf16.mxu0 0
        %905 = vmatpush1.bf16.xpose.msra.mxu0 0
        %906 = vmatprep.subr.bf16.mxu0 0
        %907 = vmatpush1.bf16.xpose.msra.mxu0 0
        %908 = vmatprep.subr.bf16.mxu0 0
        %909 = vmatpush1.bf16.xpose.msra.mxu0 0
        %910 = vmatprep.subr.bf16.mxu0 0
        %911 = vmatpush1.bf16.xpose.msra.mxu0 0
        %912 = vmatprep.subr.bf16.mxu0 0
        %913 = vmatpush1.bf16.xpose.msra.mxu0 0
        %914 = vmatprep.subr.bf16.mxu0 0
        %915 = vmatpush1.bf16.xpose.msra.mxu0 0
        %916 = vmatprep.subr.bf16.mxu0 0
        %917 = vmatpush1.bf16.xpose.msra.mxu0 0
        %918 = vmatprep.subr.bf16.mxu0 0
        %919 = vmatpush1.bf16.xpose.msra.mxu0 0
        %920 = vmatprep.subr.bf16.mxu0 0
        %921 = vmatpush1.bf16.xpose.msra.mxu0 0
        %922 = vmatprep.subr.bf16.mxu0 0
        %923 = vmatpush1.bf16.xpose.msra.mxu0 0
        %924 = vmatprep.subr.bf16.mxu0 0
        %925 = vmatpush1.bf16.xpose.msra.mxu0 0
        %926 = vmatprep.subr.bf16.mxu0 0
        %927 = vmatpush1.bf16.xpose.msra.mxu0 0
        %928 = vmatprep.subr.bf16.mxu0 0
        %929 = vmatpush1.bf16.xpose.msra.mxu0 0
        %930 = vmatprep.mubr.bf16.mxu0 0
        %931 = vmatmul.mubr.bf16.gmra.mrb[0].mxu0 %v893
        %v932 = vpop.f32.mrb[0].mxu0
        %v933 = vadd.f32 0.0, %v932
        %v934 = vpop.f32.mrb[0].mxu0
        %v935 = vpop.f32.mrb[0].mxu0
        %v936 = vpop.f32.mrb[0].mxu0
        %937 = vdwg.mxu0
        %v939 = vsel %vm891, %v884, 0
        %v942 = vsel %vm891, %v888, 0
        %944 = vmatprep.subr.bf16.mxu0 0
        %945 = vmatpush1.bf16.xpose.msra.mxu0 %v942
        %946 = vmatprep.subr.bf16.mxu0 0
        %947 = vmatpush1.bf16.xpose.msra.mxu0 0
        %948 = vmatprep.subr.bf16.mxu0 0
        %949 = vmatpush1.bf16.xpose.msra.mxu0 0
        %950 = vmatprep.subr.bf16.mxu0 0
        %951 = vmatpush1.bf16.xpose.msra.mxu0 0
        %952 = vmatprep.subr.bf16.mxu0 0
        %953 = vmatpush1.bf16.xpose.msra.mxu0 0
        %954 = vmatprep.subr.bf16.mxu0 0
        %955 = vmatpush1.bf16.xpose.msra.mxu0 0
        %956 = vmatprep.subr.bf16.mxu0 0
        %957 = vmatpush1.bf16.xpose.msra.mxu0 0
        %958 = vmatprep.subr.bf16.mxu0 0
        %959 = vmatpush1.bf16.xpose.msra.mxu0 0
        %960 = vmatprep.subr.bf16.mxu0 0
        %961 = vmatpush1.bf16.xpose.msra.mxu0 0
        %962 = vmatprep.subr.bf16.mxu0 0
        %963 = vmatpush1.bf16.xpose.msra.mxu0 0
        %964 = vmatprep.subr.bf16.mxu0 0
        %965 = vmatpush1.bf16.xpose.msra.mxu0 0
        %966 = vmatprep.subr.bf16.mxu0 0
        %967 = vmatpush1.bf16.xpose.msra.mxu0 0
        %968 = vmatprep.subr.bf16.mxu0 0
        %969 = vmatpush1.bf16.xpose.msra.mxu0 0
        %970 = vmatprep.subr.bf16.mxu0 0
        %971 = vmatpush1.bf16.xpose.msra.mxu0 0
        %972 = vmatprep.subr.bf16.mxu0 0
        %973 = vmatpush1.bf16.xpose.msra.mxu0 0
        %974 = vmatprep.subr.bf16.mxu0 0
        %975 = vmatpush1.bf16.xpose.msra.mxu0 0
        %976 = vmatprep.mubr.bf16.mxu0 0
        %977 = vmatmul.mubr.bf16.gmra.mrb[0].mxu0 %v939
        %v978 = vpop.f32.mrb[0].mxu0
        %v979 = vadd.f32 0.0, %v978
        %v980 = vpop.f32.mrb[0].mxu0
        %v981 = vpop.f32.mrb[0].mxu0
        %v982 = vpop.f32.mrb[0].mxu0
        %983 = vdwg.mxu0
        %v985 = vsel %vm891, %v885, 0
        %v988 = vsel %vm891, %v889, 0
        %990 = vmatprep.subr.bf16.mxu0 0
        %991 = vmatpush1.bf16.xpose.msra.mxu0 %v988
        %992 = vmatprep.subr.bf16.mxu0 0
        %993 = vmatpush1.bf16.xpose.msra.mxu0 0
        %994 = vmatprep.subr.bf16.mxu0 0
        %995 = vmatpush1.bf16.xpose.msra.mxu0 0
        %996 = vmatprep.subr.bf16.mxu0 0
        %997 = vmatpush1.bf16.xpose.msra.mxu0 0
        %998 = vmatprep.subr.bf16.mxu0 0
        %999 = vmatpush1.bf16.xpose.msra.mxu0 0
        %1000 = vmatprep.subr.bf16.mxu0 0
        %1001 = vmatpush1.bf16.xpose.msra.mxu0 0
        %1002 = vmatprep.subr.bf16.mxu0 0
        %1003 = vmatpush1.bf16.xpose.msra.mxu0 0
        %1004 = vmatprep.subr.bf16.mxu0 0
        %1005 = vmatpush1.bf16.xpose.msra.mxu0 0
        %1006 = vmatprep.subr.bf16.mxu0 0
        %1007 = vmatpush1.bf16.xpose.msra.mxu0 0
        %1008 = vmatprep.subr.bf16.mxu0 0
        %1009 = vmatpush1.bf16.xpose.msra.mxu0 0
        %1010 = vmatprep.subr.bf16.mxu0 0
        %1011 = vmatpush1.bf16.xpose.msra.mxu0 0
        %1012 = vmatprep.subr.bf16.mxu0 0
        %1013 = vmatpush1.bf16.xpose.msra.mxu0 0
        %1014 = vmatprep.subr.bf16.mxu0 0
        %1015 = vmatpush1.bf16.xpose.msra.mxu0 0
        %1016 = vmatprep.subr.bf16.mxu0 0
        %1017 = vmatpush1.bf16.xpose.msra.mxu0 0
        %1018 = vmatprep.subr.bf16.mxu0 0
        %1019 = vmatpush1.bf16.xpose.msra.mxu0 0
        %1020 = vmatprep.subr.bf16.mxu0 0
        %1021 = vmatpush1.bf16.xpose.msra.mxu0 0
        %1022 = vmatprep.mubr.bf16.mxu0 0
        %1023 = vmatmul.mubr.bf16.gmra.mrb[0].mxu0 %v985
        %v1024 = vpop.f32.mrb[0].mxu0
        %v1025 = vadd.f32 0.0, %v1024
        %v1026 = vpop.f32.mrb[0].mxu0
        %v1027 = vpop.f32.mrb[0].mxu0
        %v1028 = vpop.f32.mrb[0].mxu0
        %1029 = vdwg.mxu0
        %v1031 = vsel %vm891, %v886, 0
        %v1034 = vsel %vm891, %v890, 0
        %1036 = vmatprep.subr.bf16.mxu0 0
        %1037 = vmatpush1.bf16.xpose.msra.mxu0 %v1034
        %1038 = vmatprep.subr.bf16.mxu0 0
        %1039 = vmatpush1.bf16.xpose.msra.mxu0 0
        %1040 = vmatprep.subr.bf16.mxu0 0
        %1041 = vmatpush1.bf16.xpose.msra.mxu0 0
        %1042 = vmatprep.subr.bf16.mxu0 0
        %1043 = vmatpush1.bf16.xpose.msra.mxu0 0
        %1044 = vmatprep.subr.bf16.mxu0 0
        %1045 = vmatpush1.bf16.xpose.msra.mxu0 0
        %1046 = vmatprep.subr.bf16.mxu0 0
        %1047 = vmatpush1.bf16.xpose.msra.mxu0 0
        %1048 = vmatprep.subr.bf16.mxu0 0
        %1049 = vmatpush1.bf16.xpose.msra.mxu0 0
        %1050 = vmatprep.subr.bf16.mxu0 0
        %1051 = vmatpush1.bf16.xpose.msra.mxu0 0
        %1052 = vmatprep.subr.bf16.mxu0 0
        %1053 = vmatpush1.bf16.xpose.msra.mxu0 0
        %1054 = vmatprep.subr.bf16.mxu0 0
        %1055 = vmatpush1.bf16.xpose.msra.mxu0 0
        %1056 = vmatprep.subr.bf16.mxu0 0
        %1057 = vmatpush1.bf16.xpose.msra.mxu0 0
        %1058 = vmatprep.subr.bf16.mxu0 0
        %1059 = vmatpush1.bf16.xpose.msra.mxu0 0
        %1060 = vmatprep.subr.bf16.mxu0 0
        %1061 = vmatpush1.bf16.xpose.msra.mxu0 0
        %1062 = vmatprep.subr.bf16.mxu0 0
        %1063 = vmatpush1.bf16.xpose.msra.mxu0 0
        %1064 = vmatprep.subr.bf16.mxu0 0
        %1065 = vmatpush1.bf16.xpose.msra.mxu0 0
        %1066 = vmatprep.subr.bf16.mxu0 0
        %1067 = vmatpush1.bf16.xpose.msra.mxu0 0
        %1068 = vmatprep.mubr.bf16.mxu0 0
        %1069 = vmatmul.mubr.bf16.gmra.mrb[0].mxu0 %v1031
        %v1070 = vpop.f32.mrb[0].mxu0
        %v1071 = vadd.f32 0.0, %v1070
        %v1072 = vpop.f32.mrb[0].mxu0
        %v1073 = vpop.f32.mrb[0].mxu0
        %v1074 = vpop.f32.mrb[0].mxu0
        %1075 = vdwg.mxu0
        %v1076 = vmul.f32 %v933, 0.35355338
        %v1077 = vmul.f32 %v979, 0.35355338
        %v1078 = vmul.f32 %v1025, 0.35355338
        %v1079 = vmul.f32 %v1071, 0.35355338
        %v1080 = vsel %vm891, %v1076, -inf
        %1081 = vmax.xlane.f32.xlu0 %v1080
        %v1082 = vpop.xlane.xlu0 %1081
        %v1083 = vsel %vm891, %v1077, -inf
        %1084 = vmax.xlane.f32.xlu0 %v1083
        %v1085 = vpop.xlane.xlu0 %1084
        %v1086 = vsel %vm891, %v1078, -inf
        %1087 = vmax.xlane.f32.xlu0 %v1086
        %v1088 = vpop.xlane.xlu0 %1087
        %v1089 = vsel %vm891, %v1079, -inf
        %1090 = vmax.xlane.f32.xlu0 %v1089
        %v1091 = vpop.xlane.xlu0 %1090
        %v1092 = vsub.f32 %v1076, %v1082
        %v1093 = vsub.f32 %v1077, %v1085
        %v1094 = vsub.f32 %v1078, %v1088
        %v1095 = vsub.f32 %v1079, %v1091
        %v1096 = vmul.f32 %v1092, 1.442695
        %v1097 = vpow.pop %v1096
        %v1098 = vmul.f32 %v1093, 1.442695
        %v1099 = vpow.pop %v1098
        %v1100 = vmul.f32 %v1094, 1.442695
        %v1101 = vpow.pop %v1100
        %v1102 = vmul.f32 %v1095, 1.442695
        %v1103 = vpow.pop %v1102
        %v1104 = vsel %vm891, %v1097, 0.0
        %1105 = vadd.xlane.f32.xlu0 %v1104
        %v1106 = vpop.xlane.xlu0 %1105
        %v1107 = vsel %vm891, %v1099, 0.0
        %1108 = vadd.xlane.f32.xlu0 %v1107
        %v1109 = vpop.xlane.xlu0 %1108
        %v1110 = vsel %vm891, %v1101, 0.0
        %1111 = vadd.xlane.f32.xlu0 %v1110
        %v1112 = vpop.xlane.xlu0 %1111
        %v1113 = vsel %vm891, %v1103, 0.0
        %1114 = vadd.xlane.f32.xlu0 %v1113
        %v1115 = vpop.xlane.xlu0 %1114
        %v1116 = vrcp.pop %v1106
        %v1117 = vrcp.pop %v1109
        %v1118 = vrcp.pop %v1112
        %v1119 = vrcp.pop %v1115
        %v1120 = vmul.f32 %v1097, %v1116
        %v1121 = vmul.f32 %v1099, %v1117
        %v1122 = vmul.f32 %v1101, %v1118
        %v1123 = vmul.f32 %v1103, %v1119
        %v1124 = vpack.c.bf16 %v1120, %v1120
        %v1125 = vpack.c.bf16 %v1121, %v1121
        %v1126 = vpack.c.bf16 %v1122, %v1122
        %v1127 = vpack.c.bf16 %v1123, %v1123
        %v1128 = vld [vmem:[#allocation4] sm:$0xf]
        %v1129 = vld [vmem:[#allocation4 + $0x4] sm:$0xf]
        %v1130 = vld [vmem:[#allocation4 + $0x8] sm:$0xf]
        %v1131 = vld [vmem:[#allocation4 + $0xc] sm:$0xf]
        %v1133 = vsel %vm891, %v1124, 0
        %vm1135 = vcmask 1043456
        %v1137 = vsel %vm1135, %v1128, 0
        %1139 = vmatprep.subr.bf16.mxu0 0
        %1140 = vmatpush1.bf16.msra.mxu0 %v1137
        %1141 = vmatprep.subr.bf16.mxu0 0
        %1142 = vmatpush1.bf16.msra.mxu0 0
        %1143 = vmatprep.subr.bf16.mxu0 0
        %1144 = vmatpush1.bf16.msra.mxu0 0
        %1145 = vmatprep.subr.bf16.mxu0 0
        %1146 = vmatpush1.bf16.msra.mxu0 0
        %1147 = vmatprep.subr.bf16.mxu0 0
        %1148 = vmatpush1.bf16.msra.mxu0 0
        %1149 = vmatprep.subr.bf16.mxu0 0
        %1150 = vmatpush1.bf16.msra.mxu0 0
        %1151 = vmatprep.subr.bf16.mxu0 0
        %1152 = vmatpush1.bf16.msra.mxu0 0
        %1153 = vmatprep.subr.bf16.mxu0 0
        %1154 = vmatpush1.bf16.msra.mxu0 0
        %1155 = vmatprep.subr.bf16.mxu0 0
        %1156 = vmatpush1.bf16.msra.mxu0 0
        %1157 = vmatprep.subr.bf16.mxu0 0
        %1158 = vmatpush1.bf16.msra.mxu0 0
        %1159 = vmatprep.subr.bf16.mxu0 0
        %1160 = vmatpush1.bf16.msra.mxu0 0
        %1161 = vmatprep.subr.bf16.mxu0 0
        %1162 = vmatpush1.bf16.msra.mxu0 0
        %1163 = vmatprep.subr.bf16.mxu0 0
        %1164 = vmatpush1.bf16.msra.mxu0 0
        %1165 = vmatprep.subr.bf16.mxu0 0
        %1166 = vmatpush1.bf16.msra.mxu0 0
        %1167 = vmatprep.subr.bf16.mxu0 0
        %1168 = vmatpush1.bf16.msra.mxu0 0
        %1169 = vmatprep.subr.bf16.mxu0 0
        %1170 = vmatpush1.bf16.msra.mxu0 0
        %1171 = vmatprep.mubr.bf16.mxu0 0
        %1172 = vmatmul.mubr.bf16.gmra.mrb[0].mxu0 %v1133
        %v1173 = vpop.f32.mrb[0].mxu0
        %v1174 = vadd.f32 0.0, %v1173
        %v1175 = vpop.f32.mrb[0].mxu0
        %v1176 = vpop.f32.mrb[0].mxu0
        %v1177 = vpop.f32.mrb[0].mxu0
        %1178 = vdwg.mxu0
        %v1180 = vsel %vm891, %v1125, 0
        %v1183 = vsel %vm1135, %v1129, 0
        %1185 = vmatprep.subr.bf16.mxu0 0
        %1186 = vmatpush1.bf16.msra.mxu0 %v1183
        %1187 = vmatprep.subr.bf16.mxu0 0
        %1188 = vmatpush1.bf16.msra.mxu0 0
        %1189 = vmatprep.subr.bf16.mxu0 0
        %1190 = vmatpush1.bf16.msra.mxu0 0
        %1191 = vmatprep.subr.bf16.mxu0 0
        %1192 = vmatpush1.bf16.msra.mxu0 0
        %1193 = vmatprep.subr.bf16.mxu0 0
        %1194 = vmatpush1.bf16.msra.mxu0 0
        %1195 = vmatprep.subr.bf16.mxu0 0
        %1196 = vmatpush1.bf16.msra.mxu0 0
        %1197 = vmatprep.subr.bf16.mxu0 0
        %1198 = vmatpush1.bf16.msra.mxu0 0
        %1199 = vmatprep.subr.bf16.mxu0 0
        %1200 = vmatpush1.bf16.msra.mxu0 0
        %1201 = vmatprep.subr.bf16.mxu0 0
        %1202 = vmatpush1.bf16.msra.mxu0 0
        %1203 = vmatprep.subr.bf16.mxu0 0
        %1204 = vmatpush1.bf16.msra.mxu0 0
        %1205 = vmatprep.subr.bf16.mxu0 0
        %1206 = vmatpush1.bf16.msra.mxu0 0
        %1207 = vmatprep.subr.bf16.mxu0 0
        %1208 = vmatpush1.bf16.msra.mxu0 0
        %1209 = vmatprep.subr.bf16.mxu0 0
        %1210 = vmatpush1.bf16.msra.mxu0 0
        %1211 = vmatprep.subr.bf16.mxu0 0
        %1212 = vmatpush1.bf16.msra.mxu0 0
        %1213 = vmatprep.subr.bf16.mxu0 0
        %1214 = vmatpush1.bf16.msra.mxu0 0
        %1215 = vmatprep.subr.bf16.mxu0 0
        %1216 = vmatpush1.bf16.msra.mxu0 0
        %1217 = vmatprep.mubr.bf16.mxu0 0
        %1218 = vmatmul.mubr.bf16.gmra.mrb[0].mxu0 %v1180
        %v1219 = vpop.f32.mrb[0].mxu0
        %v1220 = vadd.f32 0.0, %v1219
        %v1221 = vpop.f32.mrb[0].mxu0
        %v1222 = vpop.f32.mrb[0].mxu0
        %v1223 = vpop.f32.mrb[0].mxu0
        %1224 = vdwg.mxu0
        %v1226 = vsel %vm891, %v1126, 0
        %v1229 = vsel %vm1135, %v1130, 0
        %1231 = vmatprep.subr.bf16.mxu0 0
        %1232 = vmatpush1.bf16.msra.mxu0 %v1229
        %1233 = vmatprep.subr.bf16.mxu0 0
        %1234 = vmatpush1.bf16.msra.mxu0 0
        %1235 = vmatprep.subr.bf16.mxu0 0
        %1236 = vmatpush1.bf16.msra.mxu0 0
        %1237 = vmatprep.subr.bf16.mxu0 0
        %1238 = vmatpush1.bf16.msra.mxu0 0
        %1239 = vmatprep.subr.bf16.mxu0 0
        %1240 = vmatpush1.bf16.msra.mxu0 0
        %1241 = vmatprep.subr.bf16.mxu0 0
        %1242 = vmatpush1.bf16.msra.mxu0 0
        %1243 = vmatprep.subr.bf16.mxu0 0
        %1244 = vmatpush1.bf16.msra.mxu0 0
        %1245 = vmatprep.subr.bf16.mxu0 0
        %1246 = vmatpush1.bf16.msra.mxu0 0
        %1247 = vmatprep.subr.bf16.mxu0 0
        %1248 = vmatpush1.bf16.msra.mxu0 0
        %1249 = vmatprep.subr.bf16.mxu0 0
        %1250 = vmatpush1.bf16.msra.mxu0 0
        %1251 = vmatprep.subr.bf16.mxu0 0
        %1252 = vmatpush1.bf16.msra.mxu0 0
        %1253 = vmatprep.subr.bf16.mxu0 0
        %1254 = vmatpush1.bf16.msra.mxu0 0
        %1255 = vmatprep.subr.bf16.mxu0 0
        %1256 = vmatpush1.bf16.msra.mxu0 0
        %1257 = vmatprep.subr.bf16.mxu0 0
        %1258 = vmatpush1.bf16.msra.mxu0 0
        %1259 = vmatprep.subr.bf16.mxu0 0
        %1260 = vmatpush1.bf16.msra.mxu0 0
        %1261 = vmatprep.subr.bf16.mxu0 0
        %1262 = vmatpush1.bf16.msra.mxu0 0
        %1263 = vmatprep.mubr.bf16.mxu0 0
        %1264 = vmatmul.mubr.bf16.gmra.mrb[0].mxu0 %v1226
        %v1265 = vpop.f32.mrb[0].mxu0
        %v1266 = vadd.f32 0.0, %v1265
        %v1267 = vpop.f32.mrb[0].mxu0
        %v1268 = vpop.f32.mrb[0].mxu0
        %v1269 = vpop.f32.mrb[0].mxu0
        %1270 = vdwg.mxu0
        %v1272 = vsel %vm891, %v1127, 0
        %v1275 = vsel %vm1135, %v1131, 0
        %1277 = vmatprep.subr.bf16.mxu0 0
        %1278 = vmatpush1.bf16.msra.mxu0 %v1275
        %1279 = vmatprep.subr.bf16.mxu0 0
        %1280 = vmatpush1.bf16.msra.mxu0 0
        %1281 = vmatprep.subr.bf16.mxu0 0
        %1282 = vmatpush1.bf16.msra.mxu0 0
        %1283 = vmatprep.subr.bf16.mxu0 0
        %1284 = vmatpush1.bf16.msra.mxu0 0
        %1285 = vmatprep.subr.bf16.mxu0 0
        %1286 = vmatpush1.bf16.msra.mxu0 0
        %1287 = vmatprep.subr.bf16.mxu0 0
        %1288 = vmatpush1.bf16.msra.mxu0 0
        %1289 = vmatprep.subr.bf16.mxu0 0
        %1290 = vmatpush1.bf16.msra.mxu0 0
        %1291 = vmatprep.subr.bf16.mxu0 0
        %1292 = vmatpush1.bf16.msra.mxu0 0
        %1293 = vmatprep.subr.bf16.mxu0 0
        %1294 = vmatpush1.bf16.msra.mxu0 0
        %1295 = vmatprep.subr.bf16.mxu0 0
        %1296 = vmatpush1.bf16.msra.mxu0 0
        %1297 = vmatprep.subr.bf16.mxu0 0
        %1298 = vmatpush1.bf16.msra.mxu0 0
        %1299 = vmatprep.subr.bf16.mxu0 0
        %1300 = vmatpush1.bf16.msra.mxu0 0
        %1301 = vmatprep.subr.bf16.mxu0 0
        %1302 = vmatpush1.bf16.msra.mxu0 0
        %1303 = vmatprep.subr.bf16.mxu0 0
        %1304 = vmatpush1.bf16.msra.mxu0 0
        %1305 = vmatprep.subr.bf16.mxu0 0
        %1306 = vmatpush1.bf16.msra.mxu0 0
        %1307 = vmatprep.subr.bf16.mxu0 0
        %1308 = vmatpush1.bf16.msra.mxu0 0
        %1309 = vmatprep.mubr.bf16.mxu0 0
        %1310 = vmatmul.mubr.bf16.gmra.mrb[0].mxu0 %v1272
        %v1311 = vpop.f32.mrb[0].mxu0
        %v1312 = vadd.f32 0.0, %v1311
        %v1313 = vpop.f32.mrb[0].mxu0
        %v1314 = vpop.f32.mrb[0].mxu0
        %v1315 = vpop.f32.mrb[0].mxu0
        %1316 = vdwg.mxu0
        %v1317 = vpack.c.bf16 %v1174, %v1174
        %1318 = vst.msk [vmem:[#allocation5] sm:$0xf] %vm863, %v1317
        %v1319 = vpack.c.bf16 %v1220, %v1220
        %v1321 = vunpack.c.l.b16 %v1319
        %v1322 = vpack.c.b16 %v1321, %v1321
        %1323 = vrot.lane.b32.xlu0 %v1322, 8
        %v1324 = vpop.permute.xlu0 %1323
        %vm1326 = vcmask 126016
        %1327 = vst.msk [vmem:[#allocation5] sm:$0xf] %vm1326, %v1324
        %v1328 = vpack.c.bf16 %v1266, %v1266
        %v1330 = vunpack.c.l.b16 %v1328
        %v1331 = vpack.c.b16 %v1330, %v1330
        %1332 = vrot.lane.b32.xlu0 %v1331, 16
        %v1333 = vpop.permute.xlu0 %1332
        %vm1335 = vcmask 191616
        %1336 = vst.msk [vmem:[#allocation5] sm:$0xf] %vm1335, %v1333
        %v1337 = vpack.c.bf16 %v1312, %v1312
        %v1339 = vunpack.c.l.b16 %v1337
        %v1340 = vpack.c.b16 %v1339, %v1339
        %1341 = vrot.lane.b32.xlu0 %v1340, 24
        %v1342 = vpop.permute.xlu0 %1341
        %vm1344 = vcmask 257216
        %1345 = vst.msk [vmem:[#allocation5] sm:$0xf] %vm1344, %v1342
        %v1346 = vld [vmem:[#allocation5] sm:$0xf]
        %v1347 = vld [vmem:[#allocation11] sm:$0xf]
        %v1348 = vld [vmem:[#allocation11 + $0x4] sm:$0xf]
        %v1349 = vld [vmem:[#allocation11 + $0x8] sm:$0xf]
        %v1350 = vld [vmem:[#allocation11 + $0xc] sm:$0xf]
        %v1351 = vld [vmem:[#allocation12] sm:$0x1]
        %v1353 = vlaneseq
        %v1354 = vshrl.u32 %v1353, 7
        %v1355 = vsub.s32 0, %v1354
        %v1356 = vrot.slane %v1351, %v1355
        %v1362 = vunpack.c.l.b16 %v1347
        %v1363 = vunpack.c.l.b16 %v1348
        %v1364 = vunpack.c.l.b16 %v1349
        %v1365 = vunpack.c.l.b16 %v1350
        %v1366 = vpack.c.b16 %v1363, %v1362
        %v1367 = vpack.c.b16 %v1365, %v1364
        %v1371 = vsel %vm818, %v1346, 0
        %1373 = vmatprep.subr.bf16.mxu0 0
        %1374 = vmatpush1.bf16.msra.mxu0 %v1366
        %1375 = vmatprep.subr.bf16.mxu0 0
        %1376 = vmatpush1.bf16.msra.mxu0 %v1367
        %1377 = vmatprep.subr.bf16.mxu0 0
        %1378 = vmatpush1.bf16.msra.mxu0 0
        %1379 = vmatprep.subr.bf16.mxu0 0
        %1380 = vmatpush1.bf16.msra.mxu0 0
        %1381 = vmatprep.subr.bf16.mxu0 0
        %1382 = vmatpush1.bf16.msra.mxu0 0
        %1383 = vmatprep.subr.bf16.mxu0 0
        %1384 = vmatpush1.bf16.msra.mxu0 0
        %1385 = vmatprep.subr.bf16.mxu0 0
        %1386 = vmatpush1.bf16.msra.mxu0 0
        %1387 = vmatprep.subr.bf16.mxu0 0
        %1388 = vmatpush1.bf16.msra.mxu0 0
        %1389 = vmatprep.subr.bf16.mxu0 0
        %1390 = vmatpush1.bf16.msra.mxu0 0
        %1391 = vmatprep.subr.bf16.mxu0 0
        %1392 = vmatpush1.bf16.msra.mxu0 0
        %1393 = vmatprep.subr.bf16.mxu0 0
        %1394 = vmatpush1.bf16.msra.mxu0 0
        %1395 = vmatprep.subr.bf16.mxu0 0
        %1396 = vmatpush1.bf16.msra.mxu0 0
        %1397 = vmatprep.subr.bf16.mxu0 0
        %1398 = vmatpush1.bf16.msra.mxu0 0
        %1399 = vmatprep.subr.bf16.mxu0 0
        %1400 = vmatpush1.bf16.msra.mxu0 0
        %1401 = vmatprep.subr.bf16.mxu0 0
        %1402 = vmatpush1.bf16.msra.mxu0 0
        %1403 = vmatprep.subr.bf16.mxu0 0
        %1404 = vmatpush1.bf16.msra.mxu0 0
        %1405 = vmatprep.mubr.bf16.mxu0 0
        %1406 = vmatmul.mubr.bf16.gmra.mrb[0].mxu0 %v1371
        %v1407 = vpop.f32.mrb[0].mxu0
        %v1408 = vadd.f32 %v1356, %v1407
        %v1409 = vpop.f32.mrb[0].mxu0
        %v1410 = vpop.f32.mrb[0].mxu0
        %v1411 = vpop.f32.mrb[0].mxu0
        %1412 = vdwg.mxu0
        %v1413 = vadd.f32 %v793, %v1408
        %v1414 = vld [vmem:[%s13] sm:$0x1]
        %v1415 = vld [vmem:[%s14] sm:$0x1]
        %v1416 = vsel %vm818, %v1413, 0.0
        %1417 = vadd.xlane.f32.xlu0 %v1416
        %v1418 = vpop.xlane.xlu0 %1417
        %v1419 = vrcp.pop 32.0
        %v1420 = vmul.f32 %v1418, %v1419
        %v1421 = vsub.f32 %v1413, %v1420
        %v1422 = vmul.f32 %v1421, %v1421
        %v1423 = vsel %vm818, %v1422, 0.0
        %1424 = vadd.xlane.f32.xlu0 %v1423
        %v1425 = vpop.xlane.xlu0 %1424
        %v1426 = vmul.f32 %v1425, %v1419
        %v1427 = vadd.f32 %v1426, 1e-05
        %v1428 = vrsqrt.pop %v1427
        %v1429 = vmul.f32 %v1421, %v1428
        %v1431 = vlaneseq
        %v1432 = vshrl.u32 %v1431, 7
        %v1433 = vsub.s32 0, %v1432
        %v1434 = vrot.slane %v1414, %v1433
        %v1436 = vmul.f32 %v1429, %v1434
        %v1438 = vlaneseq
        %v1439 = vshrl.u32 %v1438, 7
        %v1440 = vsub.s32 0, %v1439
        %v1441 = vrot.slane %v1415, %v1440
        %v1443 = vadd.f32 %v1436, %v1441
        %v1444 = vpack.c.bf16 %v1443, %v1443
        %v1445 = vld [vmem:[%s9] sm:$0xf]
        %v1446 = vld [vmem:[%s9 + $0x4] sm:$0xf]
        %v1447 = vld [vmem:[%s9 + $0x8] sm:$0xf]
        %v1448 = vld [vmem:[%s9 + $0xc] sm:$0xf]
        %v1449 = vld [vmem:[%s10] sm:$0x1]
        %v1451 = vlaneseq
        %v1452 = vshrl.u32 %v1451, 7
        %v1453 = vsub.s32 0, %v1452
        %v1454 = vrot.slane %v1449, %v1453
        %v1460 = vunpack.c.l.b16 %v1445
        %v1461 = vunpack.c.l.b16 %v1446
        %v1462 = vunpack.c.l.b16 %v1447
        %v1463 = vunpack.c.l.b16 %v1448
        %v1464 = vpack.c.b16 %v1461, %v1460
        %v1465 = vpack.c.b16 %v1463, %v1462
        %v1469 = vsel %vm818, %v1444, 0
        %1471 = vmatprep.subr.bf16.mxu0 0
        %1472 = vmatpush1.bf16.msra.mxu0 %v1464
        %1473 = vmatprep.subr.bf16.mxu0 0
        %1474 = vmatpush1.bf16.msra.mxu0 %v1465
        %1475 = vmatprep.subr.bf16.mxu0 0
        %1476 = vmatpush1.bf16.msra.mxu0 0
        %1477 = vmatprep.subr.bf16.mxu0 0
        %1478 = vmatpush1.bf16.msra.mxu0 0
        %1479 = vmatprep.subr.bf16.mxu0 0
        %1480 = vmatpush1.bf16.msra.mxu0 0
        %1481 = vmatprep.subr.bf16.mxu0 0
        %1482 = vmatpush1.bf16.msra.mxu0 0
        %1483 = vmatprep.subr.bf16.mxu0 0
        %1484 = vmatpush1.bf16.msra.mxu0 0
        %1485 = vmatprep.subr.bf16.mxu0 0
        %1486 = vmatpush1.bf16.msra.mxu0 0
        %1487 = vmatprep.subr.bf16.mxu0 0
        %1488 = vmatpush1.bf16.msra.mxu0 0
        %1489 = vmatprep.subr.bf16.mxu0 0
        %1490 = vmatpush1.bf16.msra.mxu0 0
        %1491 = vmatprep.subr.bf16.mxu0 0
        %1492 = vmatpush1.bf16.msra.mxu0 0
        %1493 = vmatprep.subr.bf16.mxu0 0
        %1494 = vmatpush1.bf16.msra.mxu0 0
        %1495 = vmatprep.subr.bf16.mxu0 0
        %1496 = vmatpush1.bf16.msra.mxu0 0
        %1497 = vmatprep.subr.bf16.mxu0 0
        %1498 = vmatpush1.bf16.msra.mxu0 0
        %1499 = vmatprep.subr.bf16.mxu0 0
        %1500 = vmatpush1.bf16.msra.mxu0 0
        %1501 = vmatprep.subr.bf16.mxu0 0
        %1502 = vmatpush1.bf16.msra.mxu0 0
        %1503 = vmatprep.mubr.bf16.mxu0 0
        %1504 = vmatmul.mubr.bf16.gmra.mrb[0].mxu0 %v1469
        %v1505 = vpop.f32.mrb[0].mxu0
        %v1506 = vadd.f32 %v1454, %v1505
        %v1507 = vpop.f32.mrb[0].mxu0
        %v1508 = vpop.f32.mrb[0].mxu0
        %v1509 = vpop.f32.mrb[0].mxu0
        %1510 = vdwg.mxu0
        %v1511 = vmax.f32 %v1506, 0.0
        %v1512 = vpack.c.bf16 %v1511, %v1511
        %v1513 = vld [vmem:[%s11] sm:$0xf]
        %v1514 = vld [vmem:[%s11 + $0x4] sm:$0xf]
        %v1515 = vld [vmem:[%s11 + $0x8] sm:$0xf]
        %v1516 = vld [vmem:[%s11 + $0xc] sm:$0xf]
        %v1517 = vld [vmem:[%s11 + $0x10] sm:$0xf]
        %v1518 = vld [vmem:[%s11 + $0x14] sm:$0xf]
        %v1519 = vld [vmem:[%s11 + $0x18] sm:$0xf]
        %v1520 = vld [vmem:[%s11 + $0x1c] sm:$0xf]
        %v1521 = vld [vmem:[%s12] sm:$0x1]
        %v1523 = vlaneseq
        %v1524 = vshrl.u32 %v1523, 7
        %v1525 = vsub.s32 0, %v1524
        %v1526 = vrot.slane %v1521, %v1525
        %v1536 = vunpack.c.l.b16 %v1513
        %v1537 = vunpack.c.l.b16 %v1514
        %v1538 = vunpack.c.l.b16 %v1515
        %v1539 = vunpack.c.l.b16 %v1516
        %v1540 = vunpack.c.l.b16 %v1517
        %v1541 = vunpack.c.l.b16 %v1518
        %v1542 = vunpack.c.l.b16 %v1519
        %v1543 = vunpack.c.l.b16 %v1520
        %v1544 = vpack.c.b16 %v1537, %v1536
        %v1545 = vpack.c.b16 %v1539, %v1538
        %v1546 = vpack.c.b16 %v1541, %v1540
        %v1547 = vpack.c.b16 %v1543, %v1542
        %vm1552 = vcmask 523264
        %v1554 = vsel %vm1552, %v1512, 0
        %1556 = vmatprep.subr.bf16.mxu0 0
        %1557 = vmatpush1.bf16.msra.mxu0 %v1544
        %1558 = vmatprep.subr.bf16.mxu0 0
        %1559 = vmatpush1.bf16.msra.mxu0 %v1545
        %1560 = vmatprep.subr.bf16.mxu0 0
        %1561 = vmatpush1.bf16.msra.mxu0 %v1546
        %1562 = vmatprep.subr.bf16.mxu0 0
        %1563 = vmatpush1.bf16.msra.mxu0 %v1547
        %1564 = vmatprep.subr.bf16.mxu0 0
        %1565 = vmatpush1.bf16.msra.mxu0 0
        %1566 = vmatprep.subr.bf16.mxu0 0
        %1567 = vmatpush1.bf16.msra.mxu0 0
        %1568 = vmatprep.subr.bf16.mxu0 0
        %1569 = vmatpush1.bf16.msra.mxu0 0
        %1570 = vmatprep.subr.bf16.mxu0 0
        %1571 = vmatpush1.bf16.msra.mxu0 0
        %1572 = vmatprep.subr.bf16.mxu0 0
        %1573 = vmatpush1.bf16.msra.mxu0 0
        %1574 = vmatprep.subr.bf16.mxu0 0
        %1575 = vmatpush1.bf16.msra.mxu0 0
        %1576 = vmatprep.subr.bf16.mxu0 0
        %1577 = vmatpush1.bf16.msra.mxu0 0
        %1578 = vmatprep.subr.bf16.mxu0 0
        %1579 = vmatpush1.bf16.msra.mxu0 0
        %1580 = vmatprep.subr.bf16.mxu0 0
        %1581 = vmatpush1.bf16.msra.mxu0 0
        %1582 = vmatprep.subr.bf16.mxu0 0
        %1583 = vmatpush1.bf16.msra.mxu0 0
        %1584 = vmatprep.subr.bf16.mxu0 0
        %1585 = vmatpush1.bf16.msra.mxu0 0
        %1586 = vmatprep.subr.bf16.mxu0 0
        %1587 = vmatpush1.bf16.msra.mxu0 0
        %1588 = vmatprep.mubr.bf16.mxu0 0
        %1589 = vmatmul.mubr.bf16.gmra.mrb[0].mxu0 %v1554
        %v1590 = vpop.f32.mrb[0].mxu0
        %v1591 = vadd.f32 %v1526, %v1590
        %v1592 = vpop.f32.mrb[0].mxu0
        %v1593 = vpop.f32.mrb[0].mxu0
        %v1594 = vpop.f32.mrb[0].mxu0
        %1595 = vdwg.mxu0
        %v1596 = vadd.f32 %v1443, %v1591
        %v1597 = vld [vmem:[%s15] sm:$0x1]
        %v1598 = vld [vmem:[%s16] sm:$0x1]
        %v1599 = vsel %vm818, %v1596, 0.0
        %1600 = vadd.xlane.f32.xlu0 %v1599
        %v1601 = vpop.xlane.xlu0 %1600
        %v1602 = vmul.f32 %v1601, %v1419
        %v1603 = vsub.f32 %v1596, %v1602
        %v1604 = vmul.f32 %v1603, %v1603
        %v1605 = vsel %vm818, %v1604, 0.0
        %1606 = vadd.xlane.f32.xlu0 %v1605
        %v1607 = vpop.xlane.xlu0 %1606
        %v1608 = vmul.f32 %v1607, %v1419
        %v1609 = vadd.f32 %v1608, 1e-05
        %v1610 = vrsqrt.pop %v1609
        %v1611 = vmul.f32 %v1603, %v1610
        %v1613 = vlaneseq
        %v1614 = vshrl.u32 %v1613, 7
        %v1615 = vsub.s32 0, %v1614
        %v1616 = vrot.slane %v1597, %v1615
        %v1618 = vmul.f32 %v1611, %v1616
        %v1620 = vlaneseq
        %v1621 = vshrl.u32 %v1620, 7
        %v1622 = vsub.s32 0, %v1621
        %v1623 = vrot.slane %v1598, %v1622
        %v1625 = vadd.f32 %v1618, %v1623
        %1626 = vst.msk [vmem:[%s608] sm:$0xff] %vm818, %v1625
        %s1627 = sand.u32 %s418, 1
        %s1628 = scalar_lea.sflag [#allocation8], %s1627
        %s1629 = sand.u32 %s418, 1
        %s1630 = smul.addr %s1629, 8
        %s1631 = scalar_lea.vmem [#allocation14], %s1630
        // Predicated region
        $region109: #{tpu_custom_call.1} parent=87 // pred_check
          %p1632 = pneg %p428
        $region110: #{tpu_custom_call.1} parent=87 // pred_check_branch
          %1634 = sbr.rel (%p1632) target = $region112
        $region111: #{tpu_custom_call.1} parent=87 // pred_region
          %s1636 = ssub.s32 128, 128
          %1637 = vsyncadd %s1628, %s1636
          %s1638 = sadd.s32 %s39, %s38
          %s1639 = smul.addr %s1638, 128
          %s1640 = scalar_lea.hbm %s17, %s1639
          %s1642 = sshll.u32 %s1631, 4
          %s1643 = int_to_ptr.vmem [resolvable:$true] %s1642
          %1645 = dma.vmem_to_hbm [thread:$0]  %s1643, 128, %s1640, %s1628
        $region112: #{tpu_custom_call.1} parent=87 // pred_fallthru
          _
      $region88: #{tpu_custom_call.1} parent=5 // pred_fallthru
        _
      %p1646 = scmp.le.s32.totalorder 2, %s29
      // Predicated region
      $region113: #{tpu_custom_call.1} parent=5 // pred_check
        %p1647 = pneg %p1646
      $region114: #{tpu_custom_call.1} parent=5 // pred_check_branch
        %1649 = sbr.rel (%p1647) target = $region116
      $region115: #{tpu_custom_call.1} parent=5 // pred_region
        %s1650 = ssub.s32 %s29, 2
        // Predicated region
        $region117: #{tpu_custom_call.1} parent=115 // pred_check
          %p1651 = pneg %p434
        $region118: #{tpu_custom_call.1} parent=115 // pred_check_branch
          %1653 = sbr.rel (%p1651) target = $region120
        $region119: #{tpu_custom_call.1} parent=115 // pred_region
          %s1654 = sand.u32 %s419, 1
          %s1655 = scalar_lea.sflag [#allocation8], %s1654
          %s1656 = sand.u32 %s419, 1
          %s1657 = smul.addr %s1656, 8
          %s1658 = scalar_lea.vmem [#allocation14], %s1657
          %1659 = dma.done %s1655, 128
        $region120: #{tpu_custom_call.1} parent=115 // pred_fallthru
          _
      $region116: #{tpu_custom_call.1} parent=5 // pred_fallthru
        _
    $region6: #{tpu_custom_call.1} parent=1 // loop_footer
      %s33 = sadd.s32 1, %s29
    $region7: #{tpu_custom_call.1} parent=1 // loop_footer_branch
      %28 = sbr.rel target = $region3
    $region8: #{tpu_custom_call.1} parent=1 // loop_exit
      _
    %1660 = vsyncpa [#allocation7], 1
    %s1661 = scalar_lea.sflag [#allocation7], 1
    %1662 = vsyncpa %s1661, 1
    %1663 = vsyncpa [#allocation10], 1
    %1664 = vsyncpa [#allocation13], 1
    %1665 = vsyncpa [#allocation8], 1
    %s1666 = scalar_lea.sflag [#allocation8], 1
    %1667 = vsyncpa %s1666, 1

</llo_original>
